<compile_context>
chip_gen: v7x
topology: tpu7x:2x2x1
jax: 0.10.0
libtpu: 0.0.40
codegen_flags: <defaults>
</compile_context>

<pallas_src>
import functools

import numpy as np
import jax
import jax.numpy as jnp
from jax import lax
from jax.experimental import pallas as pl
from jax.experimental.pallas import tpu as pltpu

C_IN, C_OUT, KSIZE, PAD = 30, 20, 9, 1
BN_EPS = 1e-5
NB_MAX = 32  # samples per grid step -> matmul lane width = NB * (L + 2*PAD)


# ---------------------------------------------------------------------------
# Fused (avgpool o linear-interpolate) operators on the length axis.  These
# exactly reproduce nn.AvgPool1d(k, stride=k) + F.interpolate(mode='linear',
# align_corners=False).
# ---------------------------------------------------------------------------
def _interp_matrix(lin: int, lout: int) -> np.ndarray:
    W = np.zeros((lin, lout), dtype=np.float32)
    scale = lin / lout
    for i in range(lout):
        src = scale * (i + 0.5) - 0.5
        if src < 0.0:
            src = 0.0
        i0 = int(np.floor(src))
        i0 = min(i0, lin - 1)
        i1 = i0 + 1 if i0 < lin - 1 else i0
        lam = src - i0
        W[i0, i] += 1.0 - lam
        W[i1, i] += lam
    return W


def _avgpool_matrix(lin: int, k: int) -> np.ndarray:
    lout = (lin - k) // k + 1
    P = np.zeros((lin, lout), dtype=np.float32)
    for j in range(lout):
        P[j * k:(j + 1) * k, j] = 1.0 / k
    return P


@functools.lru_cache(maxsize=None)
def _pool_interp_operators(l_out: int):
    p2 = _avgpool_matrix(l_out, 2)
    p3 = _avgpool_matrix(l_out, 3)
    a2 = (p2 @ _interp_matrix(p2.shape[1], l_out)).astype(np.float32)
    a3 = (p3 @ _interp_matrix(p3.shape[1], l_out)).astype(np.float32)
    return a2, a3


@functools.lru_cache(maxsize=None)
def _blockdiag_pool_interp(l_out: int, lp: int, nb: int):
    """Block-diagonal (nb*lp, nb*lp) operators acting per-sample on the lane
    axis.  Rows/cols for the per-sample tail positions [l_out, lp) are zero,
    which both kills the conv's cross-sample garbage in the tail and zeroes
    the tail of the branch-2/3 outputs."""
    # TODO(synk): for long sequences, replace the dense block-diagonal
    # operators with a banded / two-stage (pool-then-interp) formulation to
    # respect v7x's 64 MiB VMEM.
    a2, a3 = _pool_interp_operators(l_out)

    def blow(a):
        ap = np.zeros((lp, lp), dtype=np.float32)
        ap[:l_out, :l_out] = a
        return np.kron(np.eye(nb, dtype=np.float32), ap)

    return blow(a2), blow(a3)


# ---------------------------------------------------------------------------
# Pallas kernel: one chunk of NB samples per grid step.  All matmuls are
# 2D and lane-dense (N = NB*Lp lanes).
# ---------------------------------------------------------------------------
def _main2_kernel(x_ref, wk_ref, shift_ref, a2_ref, a3_ref, o_ref, *, nblp):
    # x_ref block: (1, C_IN, nblp + KSIZE - 1) bf16, samples packed along lanes
    # (sample s occupies lanes [s*Lp, (s+1)*Lp)); wk_ref: (KSIZE, C_OUT, C_IN).
    # Conv as 9 accumulated tap matmuls: for tap k the RHS is the input slab
    # shifted left by k lanes (valid for the first l_out lanes of each sample).
    acc = jnp.zeros((C_OUT, nblp), jnp.float32)
    for k in range(KSIZE):  # static unroll; BN scale already folded into wk
        acc = acc + jnp.dot(wk_ref[k], x_ref[0, :, k:k + nblp],
                            preferred_element_type=jnp.float32)

    # conv-bias + BN shift, then ReLU (f32 epilogue).
    y = jnp.maximum(acc + shift_ref[...], 0.0)          # (C_OUT, nblp)
    yb = y.astype(jnp.bfloat16)

    # Lane-dense full-slab stores: branch1 = conv, branch2/3 = pool+interp.
    o_ref[0, 0] = y
    o_ref[0, 1] = jnp.dot(yb, a2_ref[...], preferred_element_type=jnp.float32)
    o_ref[0, 2] = jnp.dot(yb, a3_ref[...], preferred_element_type=jnp.float32)


def main2_forward(x, params):
    """x: (N, 30, L) float32.  Returns (N, 60, L + 2*PAD - KSIZE + 1)."""
    n, c_in, L = x.shape
    assert c_in == C_IN
    lp = L + 2 * PAD
    l_out = lp - KSIZE + 1
    assert l_out >= 3, "input too short for the avgpool(3) branch"

    w, b, gamma, beta, rmean, rvar = params

    # Fold eval-mode BatchNorm scale into the conv weights (in f32, before the
    # bf16 cast); keep only shift (+ReLU) for the kernel epilogue.
    scale = gamma / jnp.sqrt(rvar + BN_EPS)
    shift = (beta + (b - rmean) * scale).reshape(C_OUT, 1).astype(jnp.float32)
    wk = jnp.transpose(w * scale[:, None, None], (2, 0, 1)).astype(jnp.bfloat16)

    # Chunk size: aim for wide lanes, but don't over-pad tiny batches.
    nb = min(NB_MAX, ((n + 7) // 8) * 8)
    n_pad = ((n + nb - 1) // nb) * nb
    g = n_pad // nb
    nblp = nb * lp

    # Block-diagonal pool+interp operators, bf16 (MXU truncates anyway).
    a2_np, a3_np = _blockdiag_pool_interp(l_out, lp, nb)
    a2 = jnp.asarray(a2_np, dtype=jnp.bfloat16)
    a3 = jnp.asarray(a3_np, dtype=jnp.bfloat16)

    # Padded input, bf16, sample-major along lanes:
    #   xin[c, i, s*lp + u] = xpad[c*nb + s, i, u]
    # plus (KSIZE-1) zero tail lanes so every tap slice [k : k+nblp] is in-bounds.
    xp = jnp.pad(x.astype(jnp.bfloat16), ((0, n_pad - n), (0, 0), (PAD, PAD)))
    xin = xp.reshape(g, nb, C_IN, lp).transpose(0, 2, 1, 3).reshape(g, C_IN, nblp)
    xin = jnp.pad(xin, ((0, 0), (0, 0), (0, KSIZE - 1)))

    kernel = functools.partial(_main2_kernel, nblp=nblp)

    out = pl.pallas_call(
        kernel,
        out_shape=jax.ShapeDtypeStruct((g, 3, C_OUT, nblp), jnp.float32),
        grid=(g,),
        in_specs=[
            pl.BlockSpec((1, C_IN, nblp + KSIZE - 1), lambda i: (i, 0, 0)),  # input chunk
            pl.BlockSpec((KSIZE, C_OUT, C_IN), lambda i: (0, 0, 0)),         # conv weights
            pl.BlockSpec((C_OUT, 1), lambda i: (0, 0)),                      # BN/bias shift
            pl.BlockSpec((nblp, nblp), lambda i: (0, 0)),                    # pool2+interp
            pl.BlockSpec((nblp, nblp), lambda i: (0, 0)),                    # pool3+interp
        ],
        out_specs=pl.BlockSpec((1, 3, C_OUT, nblp), lambda i: (i, 0, 0, 0)),
        compiler_params=pltpu.CompilerParams(
            dimension_semantics=("parallel",),
            vmem_limit_bytes=32 * 1024 * 1024),
    )(xin, wk, shift, a2, a3)

    # (g, 3, C_OUT, nb*lp) -> (N, 3*C_OUT, l_out): split lanes per sample, drop
    # the per-sample tail, one fused slice+transpose+reshape (== torch.cat).
    out = out.reshape(g, 3, C_OUT, nb, lp)[..., :l_out]
    out = out.transpose(0, 3, 1, 2, 4).reshape(n_pad, 3 * C_OUT, l_out)
    return out[:n]


# ---------------------------------------------------------------------------
# Pure-JAX reference (independent conv path, HIGHEST precision = ground truth).
# ---------------------------------------------------------------------------
def _reference_forward(x, params):
    w, b, gamma, beta, rmean, rvar = params
    l_out = x.shape[2] + 2 * PAD - KSIZE + 1
    y = lax.conv_general_dilated(
        x, w, window_strides=(1,), padding=[(PAD, PAD)],
        dimension_numbers=("NCH", "OIH", "NCH"),
        precision=lax.Precision.HIGHEST)
    y = y + b[None, :, None]
    scale = gamma / jnp.sqrt(rvar + BN_EPS)
    shift = beta - rmean * scale
    y = jnp.maximum(y * scale[None, :, None] + shift[None, :, None], 0.0)
    a2_np, a3_np = _pool_interp_operators(l_out)
    a2 = jnp.asarray(a2_np)
    a3 = jnp.asarray(a3_np)
    x2 = jnp.einsum("ncl,lm->ncm", y, a2, precision=lax.Precision.HIGHEST)
    x3 = jnp.einsum("ncl,lm->ncm", y, a3, precision=lax.Precision.HIGHEST)
    return jnp.concatenate([y, x2, x3], axis=1)


if __name__ == "__main__":
    key = jax.random.PRNGKey(0)
    kx, kw, kb, kg, kbe, km, kv = jax.random.split(key, 7)

    N, L = 2, 30                       # input (2, 30, 30) -> output (2, 60, 24)
    x = jax.random.normal(kx, (N, C_IN, L), jnp.float32)

    # Deterministic synthetic parameters (shapes from main2.__init__).
    w = 0.1 * jax.random.normal(kw, (C_OUT, C_IN, KSIZE), jnp.float32)
    b = 0.1 * jax.random.normal(kb, (C_OUT,), jnp.float32)
    gamma = 1.0 + 0.1 * jax.random.normal(kg, (C_OUT,), jnp.float32)
    beta = 0.1 * jax.random.normal(kbe, (C_OUT,), jnp.float32)
    rmean = 0.1 * jax.random.normal(km, (C_OUT,), jnp.float32)
    rvar = jnp.abs(jax.random.normal(kv, (C_OUT,), jnp.float32)) + 0.5
    params = (w, b, gamma, beta, rmean, rvar)

    fwd = jax.jit(main2_forward)
    out = jax.block_until_ready(fwd(x, params))

    ref = jax.block_until_ready(_reference_forward(x, params))
    # Kernel matmul operands are bf16 (same precision the default MXU path
    # would use); the reference uses HIGHEST, so allow rounding headroom.
    np.testing.assert_allclose(np.asarray(out), np.asarray(ref),
                               rtol=2e-2, atol=2e-2)
    assert out.shape == (N, 3 * C_OUT, L + 2 * PAD - KSIZE + 1)

    print("KERNEL_OK")
</pallas_src>

<mosaic_0001>
module attributes {stable_mosaic.version = 11 : i64} {
  func.func @_main2_kernel(%arg0: i32, %arg1: memref<1x30x264xbf16, #tpu.memory_space<vmem>>, %arg2: memref<9x20x30xbf16, #tpu.memory_space<vmem>>, %arg3: memref<20x1xf32, #tpu.memory_space<vmem>>, %arg4: memref<256x256xbf16, #tpu.memory_space<vmem>>, %arg5: memref<256x256xbf16, #tpu.memory_space<vmem>>, %arg6: memref<1x3x20x256xf32, #tpu.memory_space<vmem>>) attributes {dimension_semantics = [#tpu.dimension_semantics<parallel>], iteration_bounds = array<i64: 1>, scalar_prefetch = 0 : i64, scratch_operands = 0 : i64, tpu.core_type = #tpu.core_type<tc>, window_params = [{transform_indices = @transform_0, window_bounds = array<i64: 1, 30, 264>}, {pipeline_mode = #tpu.pipeline_mode<synchronous>, transform_indices = @transform_1, window_bounds = array<i64: 9, 20, 30>}, {pipeline_mode = #tpu.pipeline_mode<synchronous>, transform_indices = @transform_2, window_bounds = array<i64: 20, 1>}, {pipeline_mode = #tpu.pipeline_mode<synchronous>, transform_indices = @transform_3, window_bounds = array<i64: 256, 256>}, {pipeline_mode = #tpu.pipeline_mode<synchronous>, transform_indices = @transform_4, window_bounds = array<i64: 256, 256>}, {transform_indices = @transform_5, window_bounds = array<i64: 1, 3, 20, 256>}]} {
    %cst = arith.constant 0.000000e+00 : f32
    %0 = vector.broadcast %cst : f32 to vector<20x256xf32>
    %c0 = arith.constant 0 : index
    %c0_0 = arith.constant 0 : index
    %c0_1 = arith.constant 0 : index
    %1 = vector.load %arg2[%c0, %c0_0, %c0_1] : memref<9x20x30xbf16, #tpu.memory_space<vmem>>, vector<1x20x30xbf16>
    %2 = vector.shape_cast %1 : vector<1x20x30xbf16> to vector<20x30xbf16>
    %c0_2 = arith.constant 0 : index
    %c0_3 = arith.constant 0 : index
    %c0_4 = arith.constant 0 : index
    %3 = vector.load %arg1[%c0_2, %c0_3, %c0_4] : memref<1x30x264xbf16, #tpu.memory_space<vmem>>, vector<1x30x256xbf16>
    %4 = vector.shape_cast %3 : vector<1x30x256xbf16> to vector<30x256xbf16>
    %cst_5 = arith.constant dense<0.000000e+00> : vector<20x256xf32>
    %5 = tpu.matmul %2, %4, %cst_5 {dimension_numbers = #tpu.dot_dimension_numbers<[1], [0], [0], [1], [0, 0, 1, 1], [], []>} : vector<20x30xbf16>, vector<30x256xbf16>, vector<20x256xf32> -> vector<20x256xf32>
    %6 = arith.addf %0, %5 : vector<20x256xf32>
    %c1 = arith.constant 1 : index
    %c0_6 = arith.constant 0 : index
    %c0_7 = arith.constant 0 : index
    %7 = vector.load %arg2[%c1, %c0_6, %c0_7] : memref<9x20x30xbf16, #tpu.memory_space<vmem>>, vector<1x20x30xbf16>
    %8 = vector.shape_cast %7 : vector<1x20x30xbf16> to vector<20x30xbf16>
    %c0_8 = arith.constant 0 : index
    %c0_9 = arith.constant 0 : index
    %c1_10 = arith.constant 1 : index
    %9 = vector.load %arg1[%c0_8, %c0_9, %c1_10] : memref<1x30x264xbf16, #tpu.memory_space<vmem>>, vector<1x30x256xbf16>
    %10 = vector.shape_cast %9 : vector<1x30x256xbf16> to vector<30x256xbf16>
    %cst_11 = arith.constant dense<0.000000e+00> : vector<20x256xf32>
    %11 = tpu.matmul %8, %10, %cst_11 {dimension_numbers = #tpu.dot_dimension_numbers<[1], [0], [0], [1], [0, 0, 1, 1], [], []>} : vector<20x30xbf16>, vector<30x256xbf16>, vector<20x256xf32> -> vector<20x256xf32>
    %12 = arith.addf %6, %11 : vector<20x256xf32>
    %c2 = arith.constant 2 : index
    %c0_12 = arith.constant 0 : index
    %c0_13 = arith.constant 0 : index
    %13 = vector.load %arg2[%c2, %c0_12, %c0_13] : memref<9x20x30xbf16, #tpu.memory_space<vmem>>, vector<1x20x30xbf16>
    %14 = vector.shape_cast %13 : vector<1x20x30xbf16> to vector<20x30xbf16>
    %c0_14 = arith.constant 0 : index
    %c0_15 = arith.constant 0 : index
    %c2_16 = arith.constant 2 : index
    %15 = vector.load %arg1[%c0_14, %c0_15, %c2_16] : memref<1x30x264xbf16, #tpu.memory_space<vmem>>, vector<1x30x256xbf16>
    %16 = vector.shape_cast %15 : vector<1x30x256xbf16> to vector<30x256xbf16>
    %cst_17 = arith.constant dense<0.000000e+00> : vector<20x256xf32>
    %17 = tpu.matmul %14, %16, %cst_17 {dimension_numbers = #tpu.dot_dimension_numbers<[1], [0], [0], [1], [0, 0, 1, 1], [], []>} : vector<20x30xbf16>, vector<30x256xbf16>, vector<20x256xf32> -> vector<20x256xf32>
    %18 = arith.addf %12, %17 : vector<20x256xf32>
    %c3 = arith.constant 3 : index
    %c0_18 = arith.constant 0 : index
    %c0_19 = arith.constant 0 : index
    %19 = vector.load %arg2[%c3, %c0_18, %c0_19] : memref<9x20x30xbf16, #tpu.memory_space<vmem>>, vector<1x20x30xbf16>
    %20 = vector.shape_cast %19 : vector<1x20x30xbf16> to vector<20x30xbf16>
    %c0_20 = arith.constant 0 : index
    %c0_21 = arith.constant 0 : index
    %c3_22 = arith.constant 3 : index
    %21 = vector.load %arg1[%c0_20, %c0_21, %c3_22] : memref<1x30x264xbf16, #tpu.memory_space<vmem>>, vector<1x30x256xbf16>
    %22 = vector.shape_cast %21 : vector<1x30x256xbf16> to vector<30x256xbf16>
    %cst_23 = arith.constant dense<0.000000e+00> : vector<20x256xf32>
    %23 = tpu.matmul %20, %22, %cst_23 {dimension_numbers = #tpu.dot_dimension_numbers<[1], [0], [0], [1], [0, 0, 1, 1], [], []>} : vector<20x30xbf16>, vector<30x256xbf16>, vector<20x256xf32> -> vector<20x256xf32>
    %24 = arith.addf %18, %23 : vector<20x256xf32>
    %c4 = arith.constant 4 : index
    %c0_24 = arith.constant 0 : index
    %c0_25 = arith.constant 0 : index
    %25 = vector.load %arg2[%c4, %c0_24, %c0_25] : memref<9x20x30xbf16, #tpu.memory_space<vmem>>, vector<1x20x30xbf16>
    %26 = vector.shape_cast %25 : vector<1x20x30xbf16> to vector<20x30xbf16>
    %c0_26 = arith.constant 0 : index
    %c0_27 = arith.constant 0 : index
    %c4_28 = arith.constant 4 : index
    %27 = vector.load %arg1[%c0_26, %c0_27, %c4_28] : memref<1x30x264xbf16, #tpu.memory_space<vmem>>, vector<1x30x256xbf16>
    %28 = vector.shape_cast %27 : vector<1x30x256xbf16> to vector<30x256xbf16>
    %cst_29 = arith.constant dense<0.000000e+00> : vector<20x256xf32>
    %29 = tpu.matmul %26, %28, %cst_29 {dimension_numbers = #tpu.dot_dimension_numbers<[1], [0], [0], [1], [0, 0, 1, 1], [], []>} : vector<20x30xbf16>, vector<30x256xbf16>, vector<20x256xf32> -> vector<20x256xf32>
    %30 = arith.addf %24, %29 : vector<20x256xf32>
    %c5 = arith.constant 5 : index
    %c0_30 = arith.constant 0 : index
    %c0_31 = arith.constant 0 : index
    %31 = vector.load %arg2[%c5, %c0_30, %c0_31] : memref<9x20x30xbf16, #tpu.memory_space<vmem>>, vector<1x20x30xbf16>
    %32 = vector.shape_cast %31 : vector<1x20x30xbf16> to vector<20x30xbf16>
    %c0_32 = arith.constant 0 : index
    %c0_33 = arith.constant 0 : index
    %c5_34 = arith.constant 5 : index
    %33 = vector.load %arg1[%c0_32, %c0_33, %c5_34] : memref<1x30x264xbf16, #tpu.memory_space<vmem>>, vector<1x30x256xbf16>
    %34 = vector.shape_cast %33 : vector<1x30x256xbf16> to vector<30x256xbf16>
    %cst_35 = arith.constant dense<0.000000e+00> : vector<20x256xf32>
    %35 = tpu.matmul %32, %34, %cst_35 {dimension_numbers = #tpu.dot_dimension_numbers<[1], [0], [0], [1], [0, 0, 1, 1], [], []>} : vector<20x30xbf16>, vector<30x256xbf16>, vector<20x256xf32> -> vector<20x256xf32>
    %36 = arith.addf %30, %35 : vector<20x256xf32>
    %c6 = arith.constant 6 : index
    %c0_36 = arith.constant 0 : index
    %c0_37 = arith.constant 0 : index
    %37 = vector.load %arg2[%c6, %c0_36, %c0_37] : memref<9x20x30xbf16, #tpu.memory_space<vmem>>, vector<1x20x30xbf16>
    %38 = vector.shape_cast %37 : vector<1x20x30xbf16> to vector<20x30xbf16>
    %c0_38 = arith.constant 0 : index
    %c0_39 = arith.constant 0 : index
    %c6_40 = arith.constant 6 : index
    %39 = vector.load %arg1[%c0_38, %c0_39, %c6_40] : memref<1x30x264xbf16, #tpu.memory_space<vmem>>, vector<1x30x256xbf16>
    %40 = vector.shape_cast %39 : vector<1x30x256xbf16> to vector<30x256xbf16>
    %cst_41 = arith.constant dense<0.000000e+00> : vector<20x256xf32>
    %41 = tpu.matmul %38, %40, %cst_41 {dimension_numbers = #tpu.dot_dimension_numbers<[1], [0], [0], [1], [0, 0, 1, 1], [], []>} : vector<20x30xbf16>, vector<30x256xbf16>, vector<20x256xf32> -> vector<20x256xf32>
    %42 = arith.addf %36, %41 : vector<20x256xf32>
    %c7 = arith.constant 7 : index
    %c0_42 = arith.constant 0 : index
    %c0_43 = arith.constant 0 : index
    %43 = vector.load %arg2[%c7, %c0_42, %c0_43] : memref<9x20x30xbf16, #tpu.memory_space<vmem>>, vector<1x20x30xbf16>
    %44 = vector.shape_cast %43 : vector<1x20x30xbf16> to vector<20x30xbf16>
    %c0_44 = arith.constant 0 : index
    %c0_45 = arith.constant 0 : index
    %c7_46 = arith.constant 7 : index
    %45 = vector.load %arg1[%c0_44, %c0_45, %c7_46] : memref<1x30x264xbf16, #tpu.memory_space<vmem>>, vector<1x30x256xbf16>
    %46 = vector.shape_cast %45 : vector<1x30x256xbf16> to vector<30x256xbf16>
    %cst_47 = arith.constant dense<0.000000e+00> : vector<20x256xf32>
    %47 = tpu.matmul %44, %46, %cst_47 {dimension_numbers = #tpu.dot_dimension_numbers<[1], [0], [0], [1], [0, 0, 1, 1], [], []>} : vector<20x30xbf16>, vector<30x256xbf16>, vector<20x256xf32> -> vector<20x256xf32>
    %48 = arith.addf %42, %47 : vector<20x256xf32>
    %c8 = arith.constant 8 : index
    %c0_48 = arith.constant 0 : index
    %c0_49 = arith.constant 0 : index
    %49 = vector.load %arg2[%c8, %c0_48, %c0_49] : memref<9x20x30xbf16, #tpu.memory_space<vmem>>, vector<1x20x30xbf16>
    %50 = vector.shape_cast %49 : vector<1x20x30xbf16> to vector<20x30xbf16>
    %c0_50 = arith.constant 0 : index
    %c0_51 = arith.constant 0 : index
    %c8_52 = arith.constant 8 : index
    %51 = vector.load %arg1[%c0_50, %c0_51, %c8_52] : memref<1x30x264xbf16, #tpu.memory_space<vmem>>, vector<1x30x256xbf16>
    %52 = vector.shape_cast %51 : vector<1x30x256xbf16> to vector<30x256xbf16>
    %cst_53 = arith.constant dense<0.000000e+00> : vector<20x256xf32>
    %53 = tpu.matmul %50, %52, %cst_53 {dimension_numbers = #tpu.dot_dimension_numbers<[1], [0], [0], [1], [0, 0, 1, 1], [], []>} : vector<20x30xbf16>, vector<30x256xbf16>, vector<20x256xf32> -> vector<20x256xf32>
    %54 = arith.addf %48, %53 : vector<20x256xf32>
    %c0_54 = arith.constant 0 : index
    %c0_55 = arith.constant 0 : index
    %55 = vector.load %arg3[%c0_54, %c0_55] : memref<20x1xf32, #tpu.memory_space<vmem>>, vector<20x1xf32>
    %56 = vector.broadcast %55 : vector<20x1xf32> to vector<20x256xf32>
    %57 = arith.addf %54, %56 : vector<20x256xf32>
    %cst_56 = arith.constant 0.000000e+00 : f32
    %58 = vector.broadcast %cst_56 : f32 to vector<20x256xf32>
    %59 = arith.maximumf %57, %58 : vector<20x256xf32>
    %60 = arith.truncf %59 : vector<20x256xf32> to vector<20x256xbf16>
    %c0_57 = arith.constant 0 : index
    %c0_58 = arith.constant 0 : index
    %c0_59 = arith.constant 0 : index
    %c0_60 = arith.constant 0 : index
    %61 = vector.load %arg6[%c0_57, %c0_58, %c0_59, %c0_60] : memref<1x3x20x256xf32, #tpu.memory_space<vmem>>, vector<1x1x20x256xf32>
    %62 = vector.shape_cast %61 : vector<1x1x20x256xf32> to vector<20x256xf32>
    %63 = vector.shape_cast %59 : vector<20x256xf32> to vector<1x1x20x256xf32>
    tpu.vector_store %arg6[%c0_57, %c0_58, %c0_59, %c0_60], %63 {strides = array<i32>} : memref<1x3x20x256xf32, #tpu.memory_space<vmem>>, vector<1x1x20x256xf32>,
    %c0_61 = arith.constant 0 : index
    %c0_62 = arith.constant 0 : index
    %64 = vector.load %arg4[%c0_61, %c0_62] : memref<256x256xbf16, #tpu.memory_space<vmem>>, vector<256x256xbf16>
    %cst_63 = arith.constant dense<0.000000e+00> : vector<20x256xf32>
    %65 = tpu.matmul %60, %64, %cst_63 {dimension_numbers = #tpu.dot_dimension_numbers<[1], [0], [0], [1], [0, 0, 1, 1], [], []>} : vector<20x256xbf16>, vector<256x256xbf16>, vector<20x256xf32> -> vector<20x256xf32>
    %c0_64 = arith.constant 0 : index
    %c1_65 = arith.constant 1 : index
    %c0_66 = arith.constant 0 : index
    %c0_67 = arith.constant 0 : index
    %66 = vector.load %arg6[%c0_64, %c1_65, %c0_66, %c0_67] : memref<1x3x20x256xf32, #tpu.memory_space<vmem>>, vector<1x1x20x256xf32>
    %67 = vector.shape_cast %66 : vector<1x1x20x256xf32> to vector<20x256xf32>
    %68 = vector.shape_cast %65 : vector<20x256xf32> to vector<1x1x20x256xf32>
    tpu.vector_store %arg6[%c0_64, %c1_65, %c0_66, %c0_67], %68 {strides = array<i32>} : memref<1x3x20x256xf32, #tpu.memory_space<vmem>>, vector<1x1x20x256xf32>,
    %c0_68 = arith.constant 0 : index
    %c0_69 = arith.constant 0 : index
    %69 = vector.load %arg5[%c0_68, %c0_69] : memref<256x256xbf16, #tpu.memory_space<vmem>>, vector<256x256xbf16>
    %cst_70 = arith.constant dense<0.000000e+00> : vector<20x256xf32>
    %70 = tpu.matmul %60, %69, %cst_70 {dimension_numbers = #tpu.dot_dimension_numbers<[1], [0], [0], [1], [0, 0, 1, 1], [], []>} : vector<20x256xbf16>, vector<256x256xbf16>, vector<20x256xf32> -> vector<20x256xf32>
    %c0_71 = arith.constant 0 : index
    %c2_72 = arith.constant 2 : index
    %c0_73 = arith.constant 0 : index
    %c0_74 = arith.constant 0 : index
    %71 = vector.load %arg6[%c0_71, %c2_72, %c0_73, %c0_74] : memref<1x3x20x256xf32, #tpu.memory_space<vmem>>, vector<1x1x20x256xf32>
    %72 = vector.shape_cast %71 : vector<1x1x20x256xf32> to vector<20x256xf32>
    %73 = vector.shape_cast %70 : vector<20x256xf32> to vector<1x1x20x256xf32>
    tpu.vector_store %arg6[%c0_71, %c2_72, %c0_73, %c0_74], %73 {strides = array<i32>} : memref<1x3x20x256xf32, #tpu.memory_space<vmem>>, vector<1x1x20x256xf32>,
    return
  }
  func.func @transform_0(%arg0: i32) -> (i32, i32, i32) {
    %c0_i32 = arith.constant 0 : i32
    %c0_i32_0 = arith.constant 0 : i32
    %c0_i32_1 = arith.constant 0 : i32
    return %arg0, %c0_i32, %c0_i32_0 : i32, i32, i32
  }
  func.func @transform_1(%arg0: i32) -> (i32, i32, i32) {
    %c0_i32 = arith.constant 0 : i32
    %c0_i32_0 = arith.constant 0 : i32
    %c0_i32_1 = arith.constant 0 : i32
    %c0_i32_2 = arith.constant 0 : i32
    return %c0_i32, %c0_i32_0, %c0_i32_1 : i32, i32, i32
  }
  func.func @transform_2(%arg0: i32) -> (i32, i32) {
    %c0_i32 = arith.constant 0 : i32
    %c0_i32_0 = arith.constant 0 : i32
    %c0_i32_1 = arith.constant 0 : i32
    return %c0_i32, %c0_i32_0 : i32, i32
  }
  func.func @transform_3(%arg0: i32) -> (i32, i32) {
    %c0_i32 = arith.constant 0 : i32
    %c0_i32_0 = arith.constant 0 : i32
    %c0_i32_1 = arith.constant 0 : i32
    return %c0_i32, %c0_i32_0 : i32, i32
  }
  func.func @transform_4(%arg0: i32) -> (i32, i32) {
    %c0_i32 = arith.constant 0 : i32
    %c0_i32_0 = arith.constant 0 : i32
    %c0_i32_1 = arith.constant 0 : i32
    return %c0_i32, %c0_i32_0 : i32, i32
  }
  func.func @transform_5(%arg0: i32) -> (i32, i32, i32, i32) {
    %c0_i32 = arith.constant 0 : i32
    %c0_i32_0 = arith.constant 0 : i32
    %c0_i32_1 = arith.constant 0 : i32
    %c0_i32_2 = arith.constant 0 : i32
    return %arg0, %c0_i32, %c0_i32_0, %c0_i32_1 : i32, i32, i32, i32
  }
}

</mosaic_0001>

<llo_original>
// kernel: main2_forward.1
$region0: #{main2_forward.1}
  #allocation0 [shape = 'u32[]', space=smem, size = 0x4, offset = 0x4, fixed_abs, tag = 'smem constant byte address 0x4 - core index']
  #allocation1 [shape = 'u32[144,128]{1,0:T(1,128)}', space=vmem, size = 0x12000, scoped, tag = 'internal scratch']
  %s0 = inlined_call_operand.vmem [shape: bf16[1,30,264], index: 0, kind: input, shape index: {}]
  %s1 = inlined_call_operand.vmem [shape: bf16[9,20,30], index: 1, kind: input, shape index: {}]
  %s2 = inlined_call_operand.vmem [shape: f32[20,1], index: 2, kind: input, shape index: {}]
  %s3 = inlined_call_operand.vmem [shape: bf16[256,256], index: 3, kind: input, shape index: {}]
  %s4 = inlined_call_operand.vmem [shape: bf16[256,256], index: 4, kind: input, shape index: {}]
  %s5 = inlined_call_operand.vmem [shape: f32[1,3,20,256], index: 5, kind: output, shape index: {}]
  %s6 = sld [smem:[#allocation0]]
  $region30: #{main2_forward.1} parent=0
    _
  %s8 = ssub.s32 1, %s6
  %s9 = scalar_select 0, %s8, %s6
  // Predicated region
  $region2: #{main2_forward.1} parent=0 // pred_check
    _
  $region3: #{main2_forward.1} parent=0 // pred_check_branch
    %11 = sbr.rel (0) target = $region5
  $region4: #{main2_forward.1} parent=0 // pred_region
    _
  $region5: #{main2_forward.1} parent=0 // pred_fallthru
    _
  // Predicated region
  $region6: #{main2_forward.1} parent=0 // pred_check
    _
  $region7: #{main2_forward.1} parent=0 // pred_check_branch
    %13 = sbr.rel (0) target = $region9
  $region8: #{main2_forward.1} parent=0 // pred_region
    _
  $region9: #{main2_forward.1} parent=0 // pred_fallthru
    _
  // Predicated region
  $region10: #{main2_forward.1} parent=0 // pred_check
    _
  $region11: #{main2_forward.1} parent=0 // pred_check_branch
    %15 = sbr.rel (0) target = $region13
  $region12: #{main2_forward.1} parent=0 // pred_region
    _
  $region13: #{main2_forward.1} parent=0 // pred_fallthru
    _
  // Predicated region
  $region14: #{main2_forward.1} parent=0 // pred_check
    _
  $region15: #{main2_forward.1} parent=0 // pred_check_branch
    %17 = sbr.rel (0) target = $region17
  $region16: #{main2_forward.1} parent=0 // pred_region
    _
  $region17: #{main2_forward.1} parent=0 // pred_fallthru
    _
  // Predicated region
  $region18: #{main2_forward.1} parent=0 // pred_check
    _
  $region19: #{main2_forward.1} parent=0 // pred_check_branch
    %19 = sbr.rel (0) target = $region21
  $region20: #{main2_forward.1} parent=0 // pred_region
    _
  $region21: #{main2_forward.1} parent=0 // pred_fallthru
    _
  %v21 = vld [vmem:[%s1] sm:$0xf]
  %v22 = vld [vmem:[%s1 + $0x4] sm:$0xf]
  %v23 = vld [vmem:[%s1 + $0x8] sm:$0x3]
  %v24 = vld [vmem:[%s0] sm:$0xff]
  %v25 = vld [vmem:[%s0 + $0xc] sm:$0xff]
  %v26 = vld [vmem:[%s0 + $0x18] sm:$0xff]
  %v27 = vld [vmem:[%s0 + $0x24] sm:$0x77]
  %s28 = scalar_lea.vmem %s1, 12
  %v29 = vld [vmem:[%s28] sm:$0xf]
  %v30 = vld [vmem:[%s28 + $0x4] sm:$0xf]
  %v31 = vld [vmem:[%s28 + $0x8] sm:$0x3]
  %v32 = vld [vmem:[%s0 + $0x8] sm:$0xf]
  %v33 = vld [vmem:[%s0 + $0x14] sm:$0xf]
  %v34 = vld [vmem:[%s0 + $0x20] sm:$0xf]
  %v35 = vld [vmem:[%s0 + $0x2c] sm:$0x7]
  %v39 = vunpack.c.l.b16 %v29
  %v40 = vunpack.c.l.b16 %v30
  %v41 = vunpack.c.l.b16 %v31
  %v42 = vpack.c.b16 %v40, %v39
  %v43 = vpack.c.b16 %v41, %v41
  %v52 = vunpack.c.l.b16 %v24
  %v53 = vunpack.c.h.b16 %v24
  %v54 = vunpack.c.l.b16 %v32
  %v55 = vunpack.c.l.b16 %v25
  %v56 = vunpack.c.h.b16 %v25
  %v57 = vunpack.c.l.b16 %v33
  %v58 = vunpack.c.l.b16 %v26
  %v59 = vunpack.c.h.b16 %v26
  %v60 = vunpack.c.l.b16 %v34
  %v61 = vunpack.c.l.b16 %v27
  %v62 = vunpack.c.h.b16 %v27
  %v63 = vunpack.c.l.b16 %v35
  %v64 = vpack.c.b16 %v55, %v52
  %v65 = vpack.c.b16 %v56, %v53
  %v66 = vpack.c.b16 %v57, %v54
  %v67 = vpack.c.b16 %v61, %v58
  %v68 = vpack.c.b16 %v62, %v59
  %v69 = vpack.c.b16 %v63, %v60
  %70 = vrot.lane.b32.xlu0 %v64, 127
  %v71 = vpop.permute.xlu0 %70
  %72 = vrot.lane.b32.xlu0 %v65, 127
  %v73 = vpop.permute.xlu0 %72
  %74 = vrot.lane.b32.xlu0 %v66, 127
  %v75 = vpop.permute.xlu0 %74
  %76 = vrot.lane.b32.xlu0 %v67, 127
  %v77 = vpop.permute.xlu0 %76
  %78 = vrot.lane.b32.xlu0 %v68, 127
  %v79 = vpop.permute.xlu0 %78
  %80 = vrot.lane.b32.xlu0 %v69, 127
  %v81 = vpop.permute.xlu0 %80
  %vm82 = vcmask 1039360
  %v83 = vsel %vm82, %v71, %v73
  %v84 = vsel %vm82, %v73, %v75
  %v85 = vsel %vm82, %v77, %v79
  %v86 = vsel %vm82, %v79, %v81
  %vm89 = vcmask 244736
  %v91 = vsel %vm89, %v42, 0
  %v94 = vsel %vm89, %v43, 0
  %vm96 = vcmask 1046528
  %v98 = vsel %vm96, %v85, 0
  %v101 = vsel %vm96, %v86, 0
  %103 = vmatprep.subr.bf16.mxu0 %v84
  %104 = vmatpush1.bf16.msra.mxu0 %v83
  %105 = vmatprep.subr.bf16.mxu0 %v101
  %106 = vmatpush1.bf16.msra.mxu0 %v98
  %107 = vmatprep.subr.bf16.mxu0 0
  %108 = vmatpush1.bf16.msra.mxu0 0
  %109 = vmatprep.subr.bf16.mxu0 0
  %110 = vmatpush1.bf16.msra.mxu0 0
  %111 = vmatprep.subr.bf16.mxu0 0
  %112 = vmatpush1.bf16.msra.mxu0 0
  %113 = vmatprep.subr.bf16.mxu0 0
  %114 = vmatpush1.bf16.msra.mxu0 0
  %115 = vmatprep.subr.bf16.mxu0 0
  %116 = vmatpush1.bf16.msra.mxu0 0
  %117 = vmatprep.subr.bf16.mxu0 0
  %118 = vmatpush1.bf16.msra.mxu0 0
  %119 = vmatprep.subr.bf16.mxu0 0
  %120 = vmatpush1.bf16.msra.mxu0 0
  %121 = vmatprep.subr.bf16.mxu0 0
  %122 = vmatpush1.bf16.msra.mxu0 0
  %123 = vmatprep.subr.bf16.mxu0 0
  %124 = vmatpush1.bf16.msra.mxu0 0
  %125 = vmatprep.subr.bf16.mxu0 0
  %126 = vmatpush1.bf16.msra.mxu0 0
  %127 = vmatprep.subr.bf16.mxu0 0
  %128 = vmatpush1.bf16.msra.mxu0 0
  %129 = vmatprep.subr.bf16.mxu0 0
  %130 = vmatpush1.bf16.msra.mxu0 0
  %131 = vmatprep.subr.bf16.mxu0 0
  %132 = vmatpush1.bf16.msra.mxu0 0
  %133 = vmatprep.subr.bf16.mxu0 0
  %134 = vmatpush1.bf16.msra.mxu0 0
  %135 = vmatprep.mubr.bf16.mxu0 0
  %136 = vmatmul.mubr.bf16.gmra.mrb[0].mxu0 %v91
  %v137 = vpop.f32.mrb[0].mxu0
  %v138 = vadd.f32 0.0, %v137
  %v139 = vpop.f32.mrb[0].mxu0
  %v140 = vadd.f32 0.0, %v139
  %v141 = vpop.f32.mrb[0].mxu0
  %v142 = vadd.f32 0.0, %v141
  %v143 = vpop.f32.mrb[0].mxu0
  %v144 = vadd.f32 0.0, %v143
  %145 = vmatprep.mubr.bf16.mxu0 0
  %146 = vmatmul.mubr.bf16.gmra.mrb[0].mxu0 %v94
  %v147 = vpop.f32.mrb[0].mxu0
  %v148 = vadd.f32 0.0, %v147
  %v149 = vpop.f32.mrb[0].mxu0
  %v150 = vadd.f32 0.0, %v149
  %v151 = vpop.f32.mrb[0].mxu0
  %v152 = vpop.f32.mrb[0].mxu0
  %153 = vdwg.mxu0
  %v157 = vunpack.c.l.b16 %v21
  %v158 = vunpack.c.l.b16 %v22
  %v159 = vunpack.c.l.b16 %v23
  %v160 = vpack.c.b16 %v158, %v157
  %v161 = vpack.c.b16 %v159, %v159
  %v165 = vsel %vm89, %v160, 0
  %v168 = vsel %vm89, %v161, 0
  %v171 = vsel %vm96, %v67, 0
  %v174 = vsel %vm96, %v68, 0
  %176 = vmatprep.subr.bf16.mxu0 %v65
  %177 = vmatpush1.bf16.msra.mxu0 %v64
  %178 = vmatprep.subr.bf16.mxu0 %v174
  %179 = vmatpush1.bf16.msra.mxu0 %v171
  %180 = vmatprep.subr.bf16.mxu0 0
  %181 = vmatpush1.bf16.msra.mxu0 0
  %182 = vmatprep.subr.bf16.mxu0 0
  %183 = vmatpush1.bf16.msra.mxu0 0
  %184 = vmatprep.subr.bf16.mxu0 0
  %185 = vmatpush1.bf16.msra.mxu0 0
  %186 = vmatprep.subr.bf16.mxu0 0
  %187 = vmatpush1.bf16.msra.mxu0 0
  %188 = vmatprep.subr.bf16.mxu0 0
  %189 = vmatpush1.bf16.msra.mxu0 0
  %190 = vmatprep.subr.bf16.mxu0 0
  %191 = vmatpush1.bf16.msra.mxu0 0
  %192 = vmatprep.subr.bf16.mxu0 0
  %193 = vmatpush1.bf16.msra.mxu0 0
  %194 = vmatprep.subr.bf16.mxu0 0
  %195 = vmatpush1.bf16.msra.mxu0 0
  %196 = vmatprep.subr.bf16.mxu0 0
  %197 = vmatpush1.bf16.msra.mxu0 0
  %198 = vmatprep.subr.bf16.mxu0 0
  %199 = vmatpush1.bf16.msra.mxu0 0
  %200 = vmatprep.subr.bf16.mxu0 0
  %201 = vmatpush1.bf16.msra.mxu0 0
  %202 = vmatprep.subr.bf16.mxu0 0
  %203 = vmatpush1.bf16.msra.mxu0 0
  %204 = vmatprep.subr.bf16.mxu0 0
  %205 = vmatpush1.bf16.msra.mxu0 0
  %206 = vmatprep.subr.bf16.mxu0 0
  %207 = vmatpush1.bf16.msra.mxu0 0
  %208 = vmatprep.mubr.bf16.mxu0 0
  %209 = vmatmul.mubr.bf16.gmra.mrb[0].mxu0 %v165
  %v210 = vpop.f32.mrb[0].mxu0
  %v211 = vadd.f32 %v138, %v210
  %v212 = vpop.f32.mrb[0].mxu0
  %v213 = vadd.f32 %v140, %v212
  %v214 = vpop.f32.mrb[0].mxu0
  %v215 = vadd.f32 %v142, %v214
  %v216 = vpop.f32.mrb[0].mxu0
  %v217 = vadd.f32 %v144, %v216
  %218 = vmatprep.mubr.bf16.mxu0 0
  %219 = vmatmul.mubr.bf16.gmra.mrb[0].mxu0 %v168
  %v220 = vpop.f32.mrb[0].mxu0
  %v221 = vadd.f32 %v148, %v220
  %v222 = vpop.f32.mrb[0].mxu0
  %v223 = vadd.f32 %v150, %v222
  %v224 = vpop.f32.mrb[0].mxu0
  %v225 = vpop.f32.mrb[0].mxu0
  %226 = vdwg.mxu0
  %s227 = scalar_lea.vmem %s1, 24
  %v228 = vld [vmem:[%s227] sm:$0xf]
  %v229 = vld [vmem:[%s227 + $0x4] sm:$0xf]
  %v230 = vld [vmem:[%s227 + $0x8] sm:$0x3]
  %v234 = vunpack.c.l.b16 %v228
  %v235 = vunpack.c.l.b16 %v229
  %v236 = vunpack.c.l.b16 %v230
  %v237 = vpack.c.b16 %v235, %v234
  %v238 = vpack.c.b16 %v236, %v236
  %239 = vrot.lane.b32.xlu0 %v64, 126
  %v240 = vpop.permute.xlu0 %239
  %241 = vrot.lane.b32.xlu0 %v65, 126
  %v242 = vpop.permute.xlu0 %241
  %243 = vrot.lane.b32.xlu0 %v66, 126
  %v244 = vpop.permute.xlu0 %243
  %245 = vrot.lane.b32.xlu0 %v67, 126
  %v246 = vpop.permute.xlu0 %245
  %247 = vrot.lane.b32.xlu0 %v68, 126
  %v248 = vpop.permute.xlu0 %247
  %249 = vrot.lane.b32.xlu0 %v69, 126
  %v250 = vpop.permute.xlu0 %249
  %vm251 = vcmask 1031168
  %v252 = vsel %vm251, %v240, %v242
  %v253 = vsel %vm251, %v242, %v244
  %v254 = vsel %vm251, %v246, %v248
  %v255 = vsel %vm251, %v248, %v250
  %v259 = vsel %vm89, %v237, 0
  %v262 = vsel %vm89, %v238, 0
  %v265 = vsel %vm96, %v254, 0
  %v268 = vsel %vm96, %v255, 0
  %270 = vmatprep.subr.bf16.mxu0 %v253
  %271 = vmatpush1.bf16.msra.mxu0 %v252
  %272 = vmatprep.subr.bf16.mxu0 %v268
  %273 = vmatpush1.bf16.msra.mxu0 %v265
  %274 = vmatprep.subr.bf16.mxu0 0
  %275 = vmatpush1.bf16.msra.mxu0 0
  %276 = vmatprep.subr.bf16.mxu0 0
  %277 = vmatpush1.bf16.msra.mxu0 0
  %278 = vmatprep.subr.bf16.mxu0 0
  %279 = vmatpush1.bf16.msra.mxu0 0
  %280 = vmatprep.subr.bf16.mxu0 0
  %281 = vmatpush1.bf16.msra.mxu0 0
  %282 = vmatprep.subr.bf16.mxu0 0
  %283 = vmatpush1.bf16.msra.mxu0 0
  %284 = vmatprep.subr.bf16.mxu0 0
  %285 = vmatpush1.bf16.msra.mxu0 0
  %286 = vmatprep.subr.bf16.mxu0 0
  %287 = vmatpush1.bf16.msra.mxu0 0
  %288 = vmatprep.subr.bf16.mxu0 0
  %289 = vmatpush1.bf16.msra.mxu0 0
  %290 = vmatprep.subr.bf16.mxu0 0
  %291 = vmatpush1.bf16.msra.mxu0 0
  %292 = vmatprep.subr.bf16.mxu0 0
  %293 = vmatpush1.bf16.msra.mxu0 0
  %294 = vmatprep.subr.bf16.mxu0 0
  %295 = vmatpush1.bf16.msra.mxu0 0
  %296 = vmatprep.subr.bf16.mxu0 0
  %297 = vmatpush1.bf16.msra.mxu0 0
  %298 = vmatprep.subr.bf16.mxu0 0
  %299 = vmatpush1.bf16.msra.mxu0 0
  %300 = vmatprep.subr.bf16.mxu0 0
  %301 = vmatpush1.bf16.msra.mxu0 0
  %302 = vmatprep.mubr.bf16.mxu0 0
  %303 = vmatmul.mubr.bf16.gmra.mrb[0].mxu0 %v259
  %v304 = vpop.f32.mrb[0].mxu0
  %v305 = vadd.f32 0.0, %v304
  %v306 = vpop.f32.mrb[0].mxu0
  %v307 = vadd.f32 0.0, %v306
  %v308 = vpop.f32.mrb[0].mxu0
  %v309 = vadd.f32 0.0, %v308
  %v310 = vpop.f32.mrb[0].mxu0
  %v311 = vadd.f32 0.0, %v310
  %312 = vmatprep.mubr.bf16.mxu0 0
  %313 = vmatmul.mubr.bf16.gmra.mrb[0].mxu0 %v262
  %v314 = vpop.f32.mrb[0].mxu0
  %v315 = vadd.f32 0.0, %v314
  %v316 = vpop.f32.mrb[0].mxu0
  %v317 = vadd.f32 0.0, %v316
  %v318 = vpop.f32.mrb[0].mxu0
  %v319 = vpop.f32.mrb[0].mxu0
  %320 = vdwg.mxu0
  %v321 = vadd.f32 %v211, %v305
  %v322 = vadd.f32 %v213, %v307
  %v323 = vadd.f32 %v215, %v309
  %v324 = vadd.f32 %v217, %v311
  %v325 = vadd.f32 %v221, %v315
  %v326 = vadd.f32 %v223, %v317
  %s327 = scalar_lea.vmem %s1, 36
  %v328 = vld [vmem:[%s327] sm:$0xf]
  %v329 = vld [vmem:[%s327 + $0x4] sm:$0xf]
  %v330 = vld [vmem:[%s327 + $0x8] sm:$0x3]
  %v334 = vunpack.c.l.b16 %v328
  %v335 = vunpack.c.l.b16 %v329
  %v336 = vunpack.c.l.b16 %v330
  %v337 = vpack.c.b16 %v335, %v334
  %v338 = vpack.c.b16 %v336, %v336
  %339 = vrot.lane.b32.xlu0 %v64, 125
  %v340 = vpop.permute.xlu0 %339
  %341 = vrot.lane.b32.xlu0 %v65, 125
  %v342 = vpop.permute.xlu0 %341
  %343 = vrot.lane.b32.xlu0 %v66, 125
  %v344 = vpop.permute.xlu0 %343
  %345 = vrot.lane.b32.xlu0 %v67, 125
  %v346 = vpop.permute.xlu0 %345
  %347 = vrot.lane.b32.xlu0 %v68, 125
  %v348 = vpop.permute.xlu0 %347
  %349 = vrot.lane.b32.xlu0 %v69, 125
  %v350 = vpop.permute.xlu0 %349
  %vm351 = vcmask 1022976
  %v352 = vsel %vm351, %v340, %v342
  %v353 = vsel %vm351, %v342, %v344
  %v354 = vsel %vm351, %v346, %v348
  %v355 = vsel %vm351, %v348, %v350
  %v359 = vsel %vm89, %v337, 0
  %v362 = vsel %vm89, %v338, 0
  %v365 = vsel %vm96, %v354, 0
  %v368 = vsel %vm96, %v355, 0
  %370 = vmatprep.subr.bf16.mxu0 %v353
  %371 = vmatpush1.bf16.msra.mxu0 %v352
  %372 = vmatprep.subr.bf16.mxu0 %v368
  %373 = vmatpush1.bf16.msra.mxu0 %v365
  %374 = vmatprep.subr.bf16.mxu0 0
  %375 = vmatpush1.bf16.msra.mxu0 0
  %376 = vmatprep.subr.bf16.mxu0 0
  %377 = vmatpush1.bf16.msra.mxu0 0
  %378 = vmatprep.subr.bf16.mxu0 0
  %379 = vmatpush1.bf16.msra.mxu0 0
  %380 = vmatprep.subr.bf16.mxu0 0
  %381 = vmatpush1.bf16.msra.mxu0 0
  %382 = vmatprep.subr.bf16.mxu0 0
  %383 = vmatpush1.bf16.msra.mxu0 0
  %384 = vmatprep.subr.bf16.mxu0 0
  %385 = vmatpush1.bf16.msra.mxu0 0
  %386 = vmatprep.subr.bf16.mxu0 0
  %387 = vmatpush1.bf16.msra.mxu0 0
  %388 = vmatprep.subr.bf16.mxu0 0
  %389 = vmatpush1.bf16.msra.mxu0 0
  %390 = vmatprep.subr.bf16.mxu0 0
  %391 = vmatpush1.bf16.msra.mxu0 0
  %392 = vmatprep.subr.bf16.mxu0 0
  %393 = vmatpush1.bf16.msra.mxu0 0
  %394 = vmatprep.subr.bf16.mxu0 0
  %395 = vmatpush1.bf16.msra.mxu0 0
  %396 = vmatprep.subr.bf16.mxu0 0
  %397 = vmatpush1.bf16.msra.mxu0 0
  %398 = vmatprep.subr.bf16.mxu0 0
  %399 = vmatpush1.bf16.msra.mxu0 0
  %400 = vmatprep.subr.bf16.mxu0 0
  %401 = vmatpush1.bf16.msra.mxu0 0
  %402 = vmatprep.mubr.bf16.mxu0 0
  %403 = vmatmul.mubr.bf16.gmra.mrb[0].mxu0 %v359
  %v404 = vpop.f32.mrb[0].mxu0
  %v405 = vadd.f32 0.0, %v404
  %v406 = vpop.f32.mrb[0].mxu0
  %v407 = vadd.f32 0.0, %v406
  %v408 = vpop.f32.mrb[0].mxu0
  %v409 = vadd.f32 0.0, %v408
  %v410 = vpop.f32.mrb[0].mxu0
  %v411 = vadd.f32 0.0, %v410
  %412 = vmatprep.mubr.bf16.mxu0 0
  %413 = vmatmul.mubr.bf16.gmra.mrb[0].mxu0 %v362
  %v414 = vpop.f32.mrb[0].mxu0
  %v415 = vadd.f32 0.0, %v414
  %v416 = vpop.f32.mrb[0].mxu0
  %v417 = vadd.f32 0.0, %v416
  %v418 = vpop.f32.mrb[0].mxu0
  %v419 = vpop.f32.mrb[0].mxu0
  %420 = vdwg.mxu0
  %v421 = vadd.f32 %v321, %v405
  %v422 = vadd.f32 %v322, %v407
  %v423 = vadd.f32 %v323, %v409
  %v424 = vadd.f32 %v324, %v411
  %v425 = vadd.f32 %v325, %v415
  %v426 = vadd.f32 %v326, %v417
  %s427 = scalar_lea.vmem %s1, 48
  %v428 = vld [vmem:[%s427] sm:$0xf]
  %v429 = vld [vmem:[%s427 + $0x4] sm:$0xf]
  %v430 = vld [vmem:[%s427 + $0x8] sm:$0x3]
  %v434 = vunpack.c.l.b16 %v428
  %v435 = vunpack.c.l.b16 %v429
  %v436 = vunpack.c.l.b16 %v430
  %v437 = vpack.c.b16 %v435, %v434
  %v438 = vpack.c.b16 %v436, %v436
  %439 = vrot.lane.b32.xlu0 %v64, 124
  %v440 = vpop.permute.xlu0 %439
  %441 = vrot.lane.b32.xlu0 %v65, 124
  %v442 = vpop.permute.xlu0 %441
  %443 = vrot.lane.b32.xlu0 %v66, 124
  %v444 = vpop.permute.xlu0 %443
  %445 = vrot.lane.b32.xlu0 %v67, 124
  %v446 = vpop.permute.xlu0 %445
  %447 = vrot.lane.b32.xlu0 %v68, 124
  %v448 = vpop.permute.xlu0 %447
  %449 = vrot.lane.b32.xlu0 %v69, 124
  %v450 = vpop.permute.xlu0 %449
  %vm451 = vcmask 1014784
  %v452 = vsel %vm451, %v440, %v442
  %v453 = vsel %vm451, %v442, %v444
  %v454 = vsel %vm451, %v446, %v448
  %v455 = vsel %vm451, %v448, %v450
  %v459 = vsel %vm89, %v437, 0
  %v462 = vsel %vm89, %v438, 0
  %v465 = vsel %vm96, %v454, 0
  %v468 = vsel %vm96, %v455, 0
  %470 = vmatprep.subr.bf16.mxu0 %v453
  %471 = vmatpush1.bf16.msra.mxu0 %v452
  %472 = vmatprep.subr.bf16.mxu0 %v468
  %473 = vmatpush1.bf16.msra.mxu0 %v465
  %474 = vmatprep.subr.bf16.mxu0 0
  %475 = vmatpush1.bf16.msra.mxu0 0
  %476 = vmatprep.subr.bf16.mxu0 0
  %477 = vmatpush1.bf16.msra.mxu0 0
  %478 = vmatprep.subr.bf16.mxu0 0
  %479 = vmatpush1.bf16.msra.mxu0 0
  %480 = vmatprep.subr.bf16.mxu0 0
  %481 = vmatpush1.bf16.msra.mxu0 0
  %482 = vmatprep.subr.bf16.mxu0 0
  %483 = vmatpush1.bf16.msra.mxu0 0
  %484 = vmatprep.subr.bf16.mxu0 0
  %485 = vmatpush1.bf16.msra.mxu0 0
  %486 = vmatprep.subr.bf16.mxu0 0
  %487 = vmatpush1.bf16.msra.mxu0 0
  %488 = vmatprep.subr.bf16.mxu0 0
  %489 = vmatpush1.bf16.msra.mxu0 0
  %490 = vmatprep.subr.bf16.mxu0 0
  %491 = vmatpush1.bf16.msra.mxu0 0
  %492 = vmatprep.subr.bf16.mxu0 0
  %493 = vmatpush1.bf16.msra.mxu0 0
  %494 = vmatprep.subr.bf16.mxu0 0
  %495 = vmatpush1.bf16.msra.mxu0 0
  %496 = vmatprep.subr.bf16.mxu0 0
  %497 = vmatpush1.bf16.msra.mxu0 0
  %498 = vmatprep.subr.bf16.mxu0 0
  %499 = vmatpush1.bf16.msra.mxu0 0
  %500 = vmatprep.subr.bf16.mxu0 0
  %501 = vmatpush1.bf16.msra.mxu0 0
  %502 = vmatprep.mubr.bf16.mxu0 0
  %503 = vmatmul.mubr.bf16.gmra.mrb[0].mxu0 %v459
  %v504 = vpop.f32.mrb[0].mxu0
  %v505 = vadd.f32 0.0, %v504
  %v506 = vpop.f32.mrb[0].mxu0
  %v507 = vadd.f32 0.0, %v506
  %v508 = vpop.f32.mrb[0].mxu0
  %v509 = vadd.f32 0.0, %v508
  %v510 = vpop.f32.mrb[0].mxu0
  %v511 = vadd.f32 0.0, %v510
  %512 = vmatprep.mubr.bf16.mxu0 0
  %513 = vmatmul.mubr.bf16.gmra.mrb[0].mxu0 %v462
  %v514 = vpop.f32.mrb[0].mxu0
  %v515 = vadd.f32 0.0, %v514
  %v516 = vpop.f32.mrb[0].mxu0
  %v517 = vadd.f32 0.0, %v516
  %v518 = vpop.f32.mrb[0].mxu0
  %v519 = vpop.f32.mrb[0].mxu0
  %520 = vdwg.mxu0
  %v521 = vadd.f32 %v421, %v505
  %v522 = vadd.f32 %v422, %v507
  %v523 = vadd.f32 %v423, %v509
  %v524 = vadd.f32 %v424, %v511
  %v525 = vadd.f32 %v425, %v515
  %v526 = vadd.f32 %v426, %v517
  %s527 = scalar_lea.vmem %s1, 60
  %v528 = vld [vmem:[%s527] sm:$0xf]
  %v529 = vld [vmem:[%s527 + $0x4] sm:$0xf]
  %v530 = vld [vmem:[%s527 + $0x8] sm:$0x3]
  %v534 = vunpack.c.l.b16 %v528
  %v535 = vunpack.c.l.b16 %v529
  %v536 = vunpack.c.l.b16 %v530
  %v537 = vpack.c.b16 %v535, %v534
  %v538 = vpack.c.b16 %v536, %v536
  %539 = vrot.lane.b32.xlu0 %v64, 123
  %v540 = vpop.permute.xlu0 %539
  %541 = vrot.lane.b32.xlu0 %v65, 123
  %v542 = vpop.permute.xlu0 %541
  %543 = vrot.lane.b32.xlu0 %v66, 123
  %v544 = vpop.permute.xlu0 %543
  %545 = vrot.lane.b32.xlu0 %v67, 123
  %v546 = vpop.permute.xlu0 %545
  %547 = vrot.lane.b32.xlu0 %v68, 123
  %v548 = vpop.permute.xlu0 %547
  %549 = vrot.lane.b32.xlu0 %v69, 123
  %v550 = vpop.permute.xlu0 %549
  %vm551 = vcmask 1006592
  %v552 = vsel %vm551, %v540, %v542
  %v553 = vsel %vm551, %v542, %v544
  %v554 = vsel %vm551, %v546, %v548
  %v555 = vsel %vm551, %v548, %v550
  %v559 = vsel %vm89, %v537, 0
  %v562 = vsel %vm89, %v538, 0
  %v565 = vsel %vm96, %v554, 0
  %v568 = vsel %vm96, %v555, 0
  %570 = vmatprep.subr.bf16.mxu0 %v553
  %571 = vmatpush1.bf16.msra.mxu0 %v552
  %572 = vmatprep.subr.bf16.mxu0 %v568
  %573 = vmatpush1.bf16.msra.mxu0 %v565
  %574 = vmatprep.subr.bf16.mxu0 0
  %575 = vmatpush1.bf16.msra.mxu0 0
  %576 = vmatprep.subr.bf16.mxu0 0
  %577 = vmatpush1.bf16.msra.mxu0 0
  %578 = vmatprep.subr.bf16.mxu0 0
  %579 = vmatpush1.bf16.msra.mxu0 0
  %580 = vmatprep.subr.bf16.mxu0 0
  %581 = vmatpush1.bf16.msra.mxu0 0
  %582 = vmatprep.subr.bf16.mxu0 0
  %583 = vmatpush1.bf16.msra.mxu0 0
  %584 = vmatprep.subr.bf16.mxu0 0
  %585 = vmatpush1.bf16.msra.mxu0 0
  %586 = vmatprep.subr.bf16.mxu0 0
  %587 = vmatpush1.bf16.msra.mxu0 0
  %588 = vmatprep.subr.bf16.mxu0 0
  %589 = vmatpush1.bf16.msra.mxu0 0
  %590 = vmatprep.subr.bf16.mxu0 0
  %591 = vmatpush1.bf16.msra.mxu0 0
  %592 = vmatprep.subr.bf16.mxu0 0
  %593 = vmatpush1.bf16.msra.mxu0 0
  %594 = vmatprep.subr.bf16.mxu0 0
  %595 = vmatpush1.bf16.msra.mxu0 0
  %596 = vmatprep.subr.bf16.mxu0 0
  %597 = vmatpush1.bf16.msra.mxu0 0
  %598 = vmatprep.subr.bf16.mxu0 0
  %599 = vmatpush1.bf16.msra.mxu0 0
  %600 = vmatprep.subr.bf16.mxu0 0
  %601 = vmatpush1.bf16.msra.mxu0 0
  %602 = vmatprep.mubr.bf16.mxu0 0
  %603 = vmatmul.mubr.bf16.gmra.mrb[0].mxu0 %v559
  %v604 = vpop.f32.mrb[0].mxu0
  %v605 = vadd.f32 0.0, %v604
  %v606 = vpop.f32.mrb[0].mxu0
  %v607 = vadd.f32 0.0, %v606
  %v608 = vpop.f32.mrb[0].mxu0
  %v609 = vadd.f32 0.0, %v608
  %v610 = vpop.f32.mrb[0].mxu0
  %v611 = vadd.f32 0.0, %v610
  %612 = vmatprep.mubr.bf16.mxu0 0
  %613 = vmatmul.mubr.bf16.gmra.mrb[0].mxu0 %v562
  %v614 = vpop.f32.mrb[0].mxu0
  %v615 = vadd.f32 0.0, %v614
  %v616 = vpop.f32.mrb[0].mxu0
  %v617 = vadd.f32 0.0, %v616
  %v618 = vpop.f32.mrb[0].mxu0
  %v619 = vpop.f32.mrb[0].mxu0
  %620 = vdwg.mxu0
  %v621 = vadd.f32 %v521, %v605
  %v622 = vadd.f32 %v522, %v607
  %v623 = vadd.f32 %v523, %v609
  %v624 = vadd.f32 %v524, %v611
  %v625 = vadd.f32 %v525, %v615
  %v626 = vadd.f32 %v526, %v617
  %s627 = scalar_lea.vmem %s1, 72
  %v628 = vld [vmem:[%s627] sm:$0xf]
  %v629 = vld [vmem:[%s627 + $0x4] sm:$0xf]
  %v630 = vld [vmem:[%s627 + $0x8] sm:$0x3]
  %v634 = vunpack.c.l.b16 %v628
  %v635 = vunpack.c.l.b16 %v629
  %v636 = vunpack.c.l.b16 %v630
  %v637 = vpack.c.b16 %v635, %v634
  %v638 = vpack.c.b16 %v636, %v636
  %639 = vrot.lane.b32.xlu0 %v64, 122
  %v640 = vpop.permute.xlu0 %639
  %641 = vrot.lane.b32.xlu0 %v65, 122
  %v642 = vpop.permute.xlu0 %641
  %643 = vrot.lane.b32.xlu0 %v66, 122
  %v644 = vpop.permute.xlu0 %643
  %645 = vrot.lane.b32.xlu0 %v67, 122
  %v646 = vpop.permute.xlu0 %645
  %647 = vrot.lane.b32.xlu0 %v68, 122
  %v648 = vpop.permute.xlu0 %647
  %649 = vrot.lane.b32.xlu0 %v69, 122
  %v650 = vpop.permute.xlu0 %649
  %vm651 = vcmask 998400
  %v652 = vsel %vm651, %v640, %v642
  %v653 = vsel %vm651, %v642, %v644
  %v654 = vsel %vm651, %v646, %v648
  %v655 = vsel %vm651, %v648, %v650
  %v659 = vsel %vm89, %v637, 0
  %v662 = vsel %vm89, %v638, 0
  %v665 = vsel %vm96, %v654, 0
  %v668 = vsel %vm96, %v655, 0
  %670 = vmatprep.subr.bf16.mxu0 %v653
  %671 = vmatpush1.bf16.msra.mxu0 %v652
  %672 = vmatprep.subr.bf16.mxu0 %v668
  %673 = vmatpush1.bf16.msra.mxu0 %v665
  %674 = vmatprep.subr.bf16.mxu0 0
  %675 = vmatpush1.bf16.msra.mxu0 0
  %676 = vmatprep.subr.bf16.mxu0 0
  %677 = vmatpush1.bf16.msra.mxu0 0
  %678 = vmatprep.subr.bf16.mxu0 0
  %679 = vmatpush1.bf16.msra.mxu0 0
  %680 = vmatprep.subr.bf16.mxu0 0
  %681 = vmatpush1.bf16.msra.mxu0 0
  %682 = vmatprep.subr.bf16.mxu0 0
  %683 = vmatpush1.bf16.msra.mxu0 0
  %684 = vmatprep.subr.bf16.mxu0 0
  %685 = vmatpush1.bf16.msra.mxu0 0
  %686 = vmatprep.subr.bf16.mxu0 0
  %687 = vmatpush1.bf16.msra.mxu0 0
  %688 = vmatprep.subr.bf16.mxu0 0
  %689 = vmatpush1.bf16.msra.mxu0 0
  %690 = vmatprep.subr.bf16.mxu0 0
  %691 = vmatpush1.bf16.msra.mxu0 0
  %692 = vmatprep.subr.bf16.mxu0 0
  %693 = vmatpush1.bf16.msra.mxu0 0
  %694 = vmatprep.subr.bf16.mxu0 0
  %695 = vmatpush1.bf16.msra.mxu0 0
  %696 = vmatprep.subr.bf16.mxu0 0
  %697 = vmatpush1.bf16.msra.mxu0 0
  %698 = vmatprep.subr.bf16.mxu0 0
  %699 = vmatpush1.bf16.msra.mxu0 0
  %700 = vmatprep.subr.bf16.mxu0 0
  %701 = vmatpush1.bf16.msra.mxu0 0
  %702 = vmatprep.mubr.bf16.mxu0 0
  %703 = vmatmul.mubr.bf16.gmra.mrb[0].mxu0 %v659
  %v704 = vpop.f32.mrb[0].mxu0
  %v705 = vadd.f32 0.0, %v704
  %v706 = vpop.f32.mrb[0].mxu0
  %v707 = vadd.f32 0.0, %v706
  %v708 = vpop.f32.mrb[0].mxu0
  %v709 = vadd.f32 0.0, %v708
  %v710 = vpop.f32.mrb[0].mxu0
  %v711 = vadd.f32 0.0, %v710
  %712 = vmatprep.mubr.bf16.mxu0 0
  %713 = vmatmul.mubr.bf16.gmra.mrb[0].mxu0 %v662
  %v714 = vpop.f32.mrb[0].mxu0
  %v715 = vadd.f32 0.0, %v714
  %v716 = vpop.f32.mrb[0].mxu0
  %v717 = vadd.f32 0.0, %v716
  %v718 = vpop.f32.mrb[0].mxu0
  %v719 = vpop.f32.mrb[0].mxu0
  %720 = vdwg.mxu0
  %v721 = vadd.f32 %v621, %v705
  %v722 = vadd.f32 %v622, %v707
  %v723 = vadd.f32 %v623, %v709
  %v724 = vadd.f32 %v624, %v711
  %v725 = vadd.f32 %v625, %v715
  %v726 = vadd.f32 %v626, %v717
  %s727 = scalar_lea.vmem %s1, 84
  %v728 = vld [vmem:[%s727] sm:$0xf]
  %v729 = vld [vmem:[%s727 + $0x4] sm:$0xf]
  %v730 = vld [vmem:[%s727 + $0x8] sm:$0x3]
  %v734 = vunpack.c.l.b16 %v728
  %v735 = vunpack.c.l.b16 %v729
  %v736 = vunpack.c.l.b16 %v730
  %v737 = vpack.c.b16 %v735, %v734
  %v738 = vpack.c.b16 %v736, %v736
  %739 = vrot.lane.b32.xlu0 %v64, 121
  %v740 = vpop.permute.xlu0 %739
  %741 = vrot.lane.b32.xlu0 %v65, 121
  %v742 = vpop.permute.xlu0 %741
  %743 = vrot.lane.b32.xlu0 %v66, 121
  %v744 = vpop.permute.xlu0 %743
  %745 = vrot.lane.b32.xlu0 %v67, 121
  %v746 = vpop.permute.xlu0 %745
  %747 = vrot.lane.b32.xlu0 %v68, 121
  %v748 = vpop.permute.xlu0 %747
  %749 = vrot.lane.b32.xlu0 %v69, 121
  %v750 = vpop.permute.xlu0 %749
  %vm751 = vcmask 990208
  %v752 = vsel %vm751, %v740, %v742
  %v753 = vsel %vm751, %v742, %v744
  %v754 = vsel %vm751, %v746, %v748
  %v755 = vsel %vm751, %v748, %v750
  %v759 = vsel %vm89, %v737, 0
  %v762 = vsel %vm89, %v738, 0
  %v765 = vsel %vm96, %v754, 0
  %v768 = vsel %vm96, %v755, 0
  %770 = vmatprep.subr.bf16.mxu0 %v753
  %771 = vmatpush1.bf16.msra.mxu0 %v752
  %772 = vmatprep.subr.bf16.mxu0 %v768
  %773 = vmatpush1.bf16.msra.mxu0 %v765
  %774 = vmatprep.subr.bf16.mxu0 0
  %775 = vmatpush1.bf16.msra.mxu0 0
  %776 = vmatprep.subr.bf16.mxu0 0
  %777 = vmatpush1.bf16.msra.mxu0 0
  %778 = vmatprep.subr.bf16.mxu0 0
  %779 = vmatpush1.bf16.msra.mxu0 0
  %780 = vmatprep.subr.bf16.mxu0 0
  %781 = vmatpush1.bf16.msra.mxu0 0
  %782 = vmatprep.subr.bf16.mxu0 0
  %783 = vmatpush1.bf16.msra.mxu0 0
  %784 = vmatprep.subr.bf16.mxu0 0
  %785 = vmatpush1.bf16.msra.mxu0 0
  %786 = vmatprep.subr.bf16.mxu0 0
  %787 = vmatpush1.bf16.msra.mxu0 0
  %788 = vmatprep.subr.bf16.mxu0 0
  %789 = vmatpush1.bf16.msra.mxu0 0
  %790 = vmatprep.subr.bf16.mxu0 0
  %791 = vmatpush1.bf16.msra.mxu0 0
  %792 = vmatprep.subr.bf16.mxu0 0
  %793 = vmatpush1.bf16.msra.mxu0 0
  %794 = vmatprep.subr.bf16.mxu0 0
  %795 = vmatpush1.bf16.msra.mxu0 0
  %796 = vmatprep.subr.bf16.mxu0 0
  %797 = vmatpush1.bf16.msra.mxu0 0
  %798 = vmatprep.subr.bf16.mxu0 0
  %799 = vmatpush1.bf16.msra.mxu0 0
  %800 = vmatprep.subr.bf16.mxu0 0
  %801 = vmatpush1.bf16.msra.mxu0 0
  %802 = vmatprep.mubr.bf16.mxu0 0
  %803 = vmatmul.mubr.bf16.gmra.mrb[0].mxu0 %v759
  %v804 = vpop.f32.mrb[0].mxu0
  %v805 = vadd.f32 0.0, %v804
  %v806 = vpop.f32.mrb[0].mxu0
  %v807 = vadd.f32 0.0, %v806
  %v808 = vpop.f32.mrb[0].mxu0
  %v809 = vadd.f32 0.0, %v808
  %v810 = vpop.f32.mrb[0].mxu0
  %v811 = vadd.f32 0.0, %v810
  %812 = vmatprep.mubr.bf16.mxu0 0
  %813 = vmatmul.mubr.bf16.gmra.mrb[0].mxu0 %v762
  %v814 = vpop.f32.mrb[0].mxu0
  %v815 = vadd.f32 0.0, %v814
  %v816 = vpop.f32.mrb[0].mxu0
  %v817 = vadd.f32 0.0, %v816
  %v818 = vpop.f32.mrb[0].mxu0
  %v819 = vpop.f32.mrb[0].mxu0
  %820 = vdwg.mxu0
  %v821 = vadd.f32 %v721, %v805
  %v822 = vadd.f32 %v722, %v807
  %v823 = vadd.f32 %v723, %v809
  %v824 = vadd.f32 %v724, %v811
  %v825 = vadd.f32 %v725, %v815
  %v826 = vadd.f32 %v726, %v817
  %s827 = scalar_lea.vmem %s1, 96
  %v828 = vld [vmem:[%s827] sm:$0xf]
  %v829 = vld [vmem:[%s827 + $0x4] sm:$0xf]
  %v830 = vld [vmem:[%s827 + $0x8] sm:$0x3]
  %v834 = vunpack.c.l.b16 %v828
  %v835 = vunpack.c.l.b16 %v829
  %v836 = vunpack.c.l.b16 %v830
  %v837 = vpack.c.b16 %v835, %v834
  %v838 = vpack.c.b16 %v836, %v836
  %839 = vrot.lane.b32.xlu0 %v64, 120
  %v840 = vpop.permute.xlu0 %839
  %841 = vrot.lane.b32.xlu0 %v65, 120
  %v842 = vpop.permute.xlu0 %841
  %843 = vrot.lane.b32.xlu0 %v66, 120
  %v844 = vpop.permute.xlu0 %843
  %845 = vrot.lane.b32.xlu0 %v67, 120
  %v846 = vpop.permute.xlu0 %845
  %847 = vrot.lane.b32.xlu0 %v68, 120
  %v848 = vpop.permute.xlu0 %847
  %849 = vrot.lane.b32.xlu0 %v69, 120
  %v850 = vpop.permute.xlu0 %849
  %vm851 = vcmask 982016
  %v852 = vsel %vm851, %v840, %v842
  %v853 = vsel %vm851, %v842, %v844
  %v854 = vsel %vm851, %v846, %v848
  %v855 = vsel %vm851, %v848, %v850
  %v859 = vsel %vm89, %v837, 0
  %v862 = vsel %vm89, %v838, 0
  %v865 = vsel %vm96, %v854, 0
  %v868 = vsel %vm96, %v855, 0
  %870 = vmatprep.subr.bf16.mxu0 %v853
  %871 = vmatpush1.bf16.msra.mxu0 %v852
  %872 = vmatprep.subr.bf16.mxu0 %v868
  %873 = vmatpush1.bf16.msra.mxu0 %v865
  %874 = vmatprep.subr.bf16.mxu0 0
  %875 = vmatpush1.bf16.msra.mxu0 0
  %876 = vmatprep.subr.bf16.mxu0 0
  %877 = vmatpush1.bf16.msra.mxu0 0
  %878 = vmatprep.subr.bf16.mxu0 0
  %879 = vmatpush1.bf16.msra.mxu0 0
  %880 = vmatprep.subr.bf16.mxu0 0
  %881 = vmatpush1.bf16.msra.mxu0 0
  %882 = vmatprep.subr.bf16.mxu0 0
  %883 = vmatpush1.bf16.msra.mxu0 0
  %884 = vmatprep.subr.bf16.mxu0 0
  %885 = vmatpush1.bf16.msra.mxu0 0
  %886 = vmatprep.subr.bf16.mxu0 0
  %887 = vmatpush1.bf16.msra.mxu0 0
  %888 = vmatprep.subr.bf16.mxu0 0
  %889 = vmatpush1.bf16.msra.mxu0 0
  %890 = vmatprep.subr.bf16.mxu0 0
  %891 = vmatpush1.bf16.msra.mxu0 0
  %892 = vmatprep.subr.bf16.mxu0 0
  %893 = vmatpush1.bf16.msra.mxu0 0
  %894 = vmatprep.subr.bf16.mxu0 0
  %895 = vmatpush1.bf16.msra.mxu0 0
  %896 = vmatprep.subr.bf16.mxu0 0
  %897 = vmatpush1.bf16.msra.mxu0 0
  %898 = vmatprep.subr.bf16.mxu0 0
  %899 = vmatpush1.bf16.msra.mxu0 0
  %900 = vmatprep.subr.bf16.mxu0 0
  %901 = vmatpush1.bf16.msra.mxu0 0
  %902 = vmatprep.mubr.bf16.mxu0 0
  %903 = vmatmul.mubr.bf16.gmra.mrb[0].mxu0 %v859
  %v904 = vpop.f32.mrb[0].mxu0
  %v905 = vadd.f32 0.0, %v904
  %v906 = vpop.f32.mrb[0].mxu0
  %v907 = vadd.f32 0.0, %v906
  %v908 = vpop.f32.mrb[0].mxu0
  %v909 = vadd.f32 0.0, %v908
  %v910 = vpop.f32.mrb[0].mxu0
  %v911 = vadd.f32 0.0, %v910
  %912 = vmatprep.mubr.bf16.mxu0 0
  %913 = vmatmul.mubr.bf16.gmra.mrb[0].mxu0 %v862
  %v914 = vpop.f32.mrb[0].mxu0
  %v915 = vadd.f32 0.0, %v914
  %v916 = vpop.f32.mrb[0].mxu0
  %v917 = vadd.f32 0.0, %v916
  %v918 = vpop.f32.mrb[0].mxu0
  %v919 = vpop.f32.mrb[0].mxu0
  %920 = vdwg.mxu0
  %v921 = vadd.f32 %v821, %v905
  %v922 = vadd.f32 %v822, %v907
  %v923 = vadd.f32 %v823, %v909
  %v924 = vadd.f32 %v824, %v911
  %v925 = vadd.f32 %v825, %v915
  %v926 = vadd.f32 %v826, %v917
  %v927 = vld [vmem:[%s2] sm:$0xff]
  %v928 = vld [vmem:[%s2 + $0x8] sm:$0xff]
  %v929 = vld [vmem:[%s2 + $0x10] sm:$0xf]
  %931 = vset.pattern.permute.xlu0 0
  %932 = vperm.xlu0 %931, %v927
  %v933 = vpop.permute.xlu0 %932
  %936 = vset.pattern.permute.xlu0 0
  %937 = vperm.xlu0 %936, %v928
  %v938 = vpop.permute.xlu0 %937
  %941 = vset.pattern.permute.xlu0 0
  %942 = vperm.xlu0 %941, %v929
  %v943 = vpop.permute.xlu0 %942
  %v945 = vadd.f32 %v921, %v933
  %v946 = vadd.f32 %v922, %v933
  %v947 = vadd.f32 %v923, %v938
  %v948 = vadd.f32 %v924, %v938
  %v949 = vadd.f32 %v925, %v943
  %v950 = vadd.f32 %v926, %v943
  %v951 = vmax.f32 %v945, 0.0
  %v952 = vmax.f32 %v946, 0.0
  %v953 = vmax.f32 %v947, 0.0
  %v954 = vmax.f32 %v948, 0.0
  %v955 = vmax.f32 %v949, 0.0
  %v956 = vmax.f32 %v950, 0.0
  %v957 = vpack.c.bf16 %v953, %v951
  %v958 = vpack.c.bf16 %v954, %v952
  %v959 = vpack.c.bf16 %v955, %v955
  %v960 = vpack.c.bf16 %v956, %v956
  %961 = vst [vmem:[%s5] sm:$0xff] %v951
  %962 = vst [vmem:[%s5 + $0x8] sm:$0xff] %v952
  %963 = vst [vmem:[%s5 + $0x10] sm:$0xff] %v953
  %964 = vst [vmem:[%s5 + $0x18] sm:$0xff] %v954
  %965 = vst [vmem:[%s5 + $0x20] sm:$0xf] %v955
  %966 = vst [vmem:[%s5 + $0x28] sm:$0xf] %v956
  %v967 = vld [vmem:[%s3] sm:$0xff]
  %v968 = vld [vmem:[%s3 + $0x8] sm:$0xff]
  %v969 = vld [vmem:[%s3 + $0x10] sm:$0xff]
  %v970 = vld [vmem:[%s3 + $0x18] sm:$0xff]
  %v971 = vld [vmem:[%s3 + $0x20] sm:$0xff]
  %v972 = vld [vmem:[%s3 + $0x28] sm:$0xff]
  %v973 = vld [vmem:[%s3 + $0x30] sm:$0xff]
  %v974 = vld [vmem:[%s3 + $0x38] sm:$0xff]
  %v975 = vld [vmem:[%s3 + $0x40] sm:$0xff]
  %v976 = vld [vmem:[%s3 + $0x48] sm:$0xff]
  %v977 = vld [vmem:[%s3 + $0x50] sm:$0xff]
  %v978 = vld [vmem:[%s3 + $0x58] sm:$0xff]
  %v979 = vld [vmem:[%s3 + $0x60] sm:$0xff]
  %v980 = vld [vmem:[%s3 + $0x68] sm:$0xff]
  %v981 = vld [vmem:[%s3 + $0x70] sm:$0xff]
  %v982 = vld [vmem:[%s3 + $0x78] sm:$0xff]
  %v983 = vld [vmem:[%s3 + $0x80] sm:$0xff]
  %v984 = vld [vmem:[%s3 + $0x88] sm:$0xff]
  %v985 = vld [vmem:[%s3 + $0x90] sm:$0xff]
  %v986 = vld [vmem:[%s3 + $0x98] sm:$0xff]
  %v987 = vld [vmem:[%s3 + $0xa0] sm:$0xff]
  %v988 = vld [vmem:[%s3 + $0xa8] sm:$0xff]
  %v989 = vld [vmem:[%s3 + $0xb0] sm:$0xff]
  %v990 = vld [vmem:[%s3 + $0xb8] sm:$0xff]
  %v991 = vld [vmem:[%s3 + $0xc0] sm:$0xff]
  %v992 = vld [vmem:[%s3 + $0xc8] sm:$0xff]
  %v993 = vld [vmem:[%s3 + $0xd0] sm:$0xff]
  %v994 = vld [vmem:[%s3 + $0xd8] sm:$0xff]
  %v995 = vld [vmem:[%s3 + $0xe0] sm:$0xff]
  %v996 = vld [vmem:[%s3 + $0xe8] sm:$0xff]
  %v997 = vld [vmem:[%s3 + $0xf0] sm:$0xff]
  %v998 = vld [vmem:[%s3 + $0xf8] sm:$0xff]
  %v1031 = vunpack.c.l.b16 %v967
  %v1032 = vunpack.c.h.b16 %v967
  %v1033 = vunpack.c.l.b16 %v968
  %v1034 = vunpack.c.h.b16 %v968
  %v1035 = vunpack.c.l.b16 %v969
  %v1036 = vunpack.c.h.b16 %v969
  %v1037 = vunpack.c.l.b16 %v970
  %v1038 = vunpack.c.h.b16 %v970
  %v1039 = vunpack.c.l.b16 %v971
  %v1040 = vunpack.c.h.b16 %v971
  %v1041 = vunpack.c.l.b16 %v972
  %v1042 = vunpack.c.h.b16 %v972
  %v1043 = vunpack.c.l.b16 %v973
  %v1044 = vunpack.c.h.b16 %v973
  %v1045 = vunpack.c.l.b16 %v974
  %v1046 = vunpack.c.h.b16 %v974
  %v1047 = vunpack.c.l.b16 %v975
  %v1048 = vunpack.c.h.b16 %v975
  %v1049 = vunpack.c.l.b16 %v976
  %v1050 = vunpack.c.h.b16 %v976
  %v1051 = vunpack.c.l.b16 %v977
  %v1052 = vunpack.c.h.b16 %v977
  %v1053 = vunpack.c.l.b16 %v978
  %v1054 = vunpack.c.h.b16 %v978
  %v1055 = vunpack.c.l.b16 %v979
  %v1056 = vunpack.c.h.b16 %v979
  %v1057 = vunpack.c.l.b16 %v980
  %v1058 = vunpack.c.h.b16 %v980
  %v1059 = vunpack.c.l.b16 %v981
  %v1060 = vunpack.c.h.b16 %v981
  %v1061 = vunpack.c.l.b16 %v982
  %v1062 = vunpack.c.h.b16 %v982
  %v1063 = vunpack.c.l.b16 %v983
  %v1064 = vunpack.c.h.b16 %v983
  %v1065 = vunpack.c.l.b16 %v984
  %v1066 = vunpack.c.h.b16 %v984
  %v1067 = vunpack.c.l.b16 %v985
  %v1068 = vunpack.c.h.b16 %v985
  %v1069 = vunpack.c.l.b16 %v986
  %v1070 = vunpack.c.h.b16 %v986
  %v1071 = vunpack.c.l.b16 %v987
  %v1072 = vunpack.c.h.b16 %v987
  %v1073 = vunpack.c.l.b16 %v988
  %v1074 = vunpack.c.h.b16 %v988
  %v1075 = vunpack.c.l.b16 %v989
  %v1076 = vunpack.c.h.b16 %v989
  %v1077 = vunpack.c.l.b16 %v990
  %v1078 = vunpack.c.h.b16 %v990
  %v1079 = vunpack.c.l.b16 %v991
  %v1080 = vunpack.c.h.b16 %v991
  %v1081 = vunpack.c.l.b16 %v992
  %v1082 = vunpack.c.h.b16 %v992
  %v1083 = vunpack.c.l.b16 %v993
  %v1084 = vunpack.c.h.b16 %v993
  %v1085 = vunpack.c.l.b16 %v994
  %v1086 = vunpack.c.h.b16 %v994
  %v1087 = vunpack.c.l.b16 %v995
  %v1088 = vunpack.c.h.b16 %v995
  %v1089 = vunpack.c.l.b16 %v996
  %v1090 = vunpack.c.h.b16 %v996
  %v1091 = vunpack.c.l.b16 %v997
  %v1092 = vunpack.c.h.b16 %v997
  %v1093 = vunpack.c.l.b16 %v998
  %v1094 = vunpack.c.h.b16 %v998
  %v1095 = vpack.c.b16 %v1033, %v1031
  %v1096 = vpack.c.b16 %v1034, %v1032
  %v1097 = vpack.c.b16 %v1037, %v1035
  %v1098 = vpack.c.b16 %v1038, %v1036
  %v1099 = vpack.c.b16 %v1041, %v1039
  %v1100 = vpack.c.b16 %v1042, %v1040
  %v1101 = vpack.c.b16 %v1045, %v1043
  %v1102 = vpack.c.b16 %v1046, %v1044
  %v1103 = vpack.c.b16 %v1049, %v1047
  %v1104 = vpack.c.b16 %v1050, %v1048
  %v1105 = vpack.c.b16 %v1053, %v1051
  %v1106 = vpack.c.b16 %v1054, %v1052
  %v1107 = vpack.c.b16 %v1057, %v1055
  %v1108 = vpack.c.b16 %v1058, %v1056
  %v1109 = vpack.c.b16 %v1061, %v1059
  %v1110 = vpack.c.b16 %v1062, %v1060
  %v1111 = vpack.c.b16 %v1065, %v1063
  %v1112 = vpack.c.b16 %v1066, %v1064
  %v1113 = vpack.c.b16 %v1069, %v1067
  %v1114 = vpack.c.b16 %v1070, %v1068
  %v1115 = vpack.c.b16 %v1073, %v1071
  %v1116 = vpack.c.b16 %v1074, %v1072
  %v1117 = vpack.c.b16 %v1077, %v1075
  %v1118 = vpack.c.b16 %v1078, %v1076
  %v1119 = vpack.c.b16 %v1081, %v1079
  %v1120 = vpack.c.b16 %v1082, %v1080
  %v1121 = vpack.c.b16 %v1085, %v1083
  %v1122 = vpack.c.b16 %v1086, %v1084
  %v1123 = vpack.c.b16 %v1089, %v1087
  %v1124 = vpack.c.b16 %v1090, %v1088
  %v1125 = vpack.c.b16 %v1093, %v1091
  %v1126 = vpack.c.b16 %v1094, %v1092
  %1159 = vmatprep.subr.bf16.mxu0 %v1096
  %1160 = vmatpush1.bf16.msra.mxu0 %v1095
  %1161 = vmatprep.subr.bf16.mxu0 %v1098
  %1162 = vmatpush1.bf16.msra.mxu0 %v1097
  %1163 = vmatprep.subr.bf16.mxu0 %v1100
  %1164 = vmatpush1.bf16.msra.mxu0 %v1099
  %1165 = vmatprep.subr.bf16.mxu0 %v1102
  %1166 = vmatpush1.bf16.msra.mxu0 %v1101
  %1167 = vmatprep.subr.bf16.mxu0 %v1104
  %1168 = vmatpush1.bf16.msra.mxu0 %v1103
  %1169 = vmatprep.subr.bf16.mxu0 %v1106
  %1170 = vmatpush1.bf16.msra.mxu0 %v1105
  %1171 = vmatprep.subr.bf16.mxu0 %v1108
  %1172 = vmatpush1.bf16.msra.mxu0 %v1107
  %1173 = vmatprep.subr.bf16.mxu0 %v1110
  %1174 = vmatpush1.bf16.msra.mxu0 %v1109
  %1175 = vmatprep.subr.bf16.mxu0 %v1112
  %1176 = vmatpush1.bf16.msra.mxu0 %v1111
  %1177 = vmatprep.subr.bf16.mxu0 %v1114
  %1178 = vmatpush1.bf16.msra.mxu0 %v1113
  %1179 = vmatprep.subr.bf16.mxu0 %v1116
  %1180 = vmatpush1.bf16.msra.mxu0 %v1115
  %1181 = vmatprep.subr.bf16.mxu0 %v1118
  %1182 = vmatpush1.bf16.msra.mxu0 %v1117
  %1183 = vmatprep.subr.bf16.mxu0 %v1120
  %1184 = vmatpush1.bf16.msra.mxu0 %v1119
  %1185 = vmatprep.subr.bf16.mxu0 %v1122
  %1186 = vmatpush1.bf16.msra.mxu0 %v1121
  %1187 = vmatprep.subr.bf16.mxu0 %v1124
  %1188 = vmatpush1.bf16.msra.mxu0 %v1123
  %1189 = vmatprep.subr.bf16.mxu0 %v1126
  %1190 = vmatpush1.bf16.msra.mxu0 %v1125
  %1191 = vmatprep.mubr.bf16.mxu0 %v958
  %1192 = vmatmul.mubr.bf16.gmra.mrb[0].mxu0 %v957
  %v1193 = vpop.f32.mrb[0].mxu0
  %v1194 = vadd.f32 0.0, %v1193
  %v1195 = vpop.f32.mrb[0].mxu0
  %v1196 = vadd.f32 0.0, %v1195
  %v1197 = vpop.f32.mrb[0].mxu0
  %v1198 = vadd.f32 0.0, %v1197
  %v1199 = vpop.f32.mrb[0].mxu0
  %v1200 = vadd.f32 0.0, %v1199
  %1201 = vmatprep.mubr.bf16.mxu0 %v960
  %1202 = vmatmul.mubr.bf16.gmra.mrb[0].mxu0 %v959
  %v1203 = vpop.f32.mrb[0].mxu0
  %v1204 = vadd.f32 0.0, %v1203
  %v1205 = vpop.f32.mrb[0].mxu0
  %v1206 = vadd.f32 0.0, %v1205
  %v1207 = vpop.f32.mrb[0].mxu0
  %v1208 = vpop.f32.mrb[0].mxu0
  %1209 = vdwg.mxu0
  %s1210 = scalar_lea.vmem %s5, 48
  %1211 = vst [vmem:[%s1210] sm:$0xff] %v1194
  %1212 = vst [vmem:[%s1210 + $0x8] sm:$0xff] %v1196
  %1213 = vst [vmem:[%s1210 + $0x10] sm:$0xff] %v1198
  %1214 = vst [vmem:[%s1210 + $0x18] sm:$0xff] %v1200
  %1215 = vst [vmem:[%s1210 + $0x20] sm:$0xf] %v1204
  %1216 = vst [vmem:[%s1210 + $0x28] sm:$0xf] %v1206
  %v1217 = vld [vmem:[%s4] sm:$0xff]
  %v1218 = vld [vmem:[%s4 + $0x8] sm:$0xff]
  %v1219 = vld [vmem:[%s4 + $0x10] sm:$0xff]
  %v1220 = vld [vmem:[%s4 + $0x18] sm:$0xff]
  %v1221 = vld [vmem:[%s4 + $0x20] sm:$0xff]
  %v1222 = vld [vmem:[%s4 + $0x28] sm:$0xff]
  %v1223 = vld [vmem:[%s4 + $0x30] sm:$0xff]
  %v1224 = vld [vmem:[%s4 + $0x38] sm:$0xff]
  %v1225 = vld [vmem:[%s4 + $0x40] sm:$0xff]
  %v1226 = vld [vmem:[%s4 + $0x48] sm:$0xff]
  %v1227 = vld [vmem:[%s4 + $0x50] sm:$0xff]
  %v1228 = vld [vmem:[%s4 + $0x58] sm:$0xff]
  %v1229 = vld [vmem:[%s4 + $0x60] sm:$0xff]
  %v1230 = vld [vmem:[%s4 + $0x68] sm:$0xff]
  %v1231 = vld [vmem:[%s4 + $0x70] sm:$0xff]
  %v1232 = vld [vmem:[%s4 + $0x78] sm:$0xff]
  %v1233 = vld [vmem:[%s4 + $0x80] sm:$0xff]
  %v1234 = vld [vmem:[%s4 + $0x88] sm:$0xff]
  %v1235 = vld [vmem:[%s4 + $0x90] sm:$0xff]
  %v1236 = vld [vmem:[%s4 + $0x98] sm:$0xff]
  %v1237 = vld [vmem:[%s4 + $0xa0] sm:$0xff]
  %v1238 = vld [vmem:[%s4 + $0xa8] sm:$0xff]
  %v1239 = vld [vmem:[%s4 + $0xb0] sm:$0xff]
  %v1240 = vld [vmem:[%s4 + $0xb8] sm:$0xff]
  %v1241 = vld [vmem:[%s4 + $0xc0] sm:$0xff]
  %v1242 = vld [vmem:[%s4 + $0xc8] sm:$0xff]
  %v1243 = vld [vmem:[%s4 + $0xd0] sm:$0xff]
  %v1244 = vld [vmem:[%s4 + $0xd8] sm:$0xff]
  %v1245 = vld [vmem:[%s4 + $0xe0] sm:$0xff]
  %v1246 = vld [vmem:[%s4 + $0xe8] sm:$0xff]
  %v1247 = vld [vmem:[%s4 + $0xf0] sm:$0xff]
  %v1248 = vld [vmem:[%s4 + $0xf8] sm:$0xff]
  %v1281 = vunpack.c.l.b16 %v1217
  %v1282 = vunpack.c.h.b16 %v1217
  %v1283 = vunpack.c.l.b16 %v1218
  %v1284 = vunpack.c.h.b16 %v1218
  %v1285 = vunpack.c.l.b16 %v1219
  %v1286 = vunpack.c.h.b16 %v1219
  %v1287 = vunpack.c.l.b16 %v1220
  %v1288 = vunpack.c.h.b16 %v1220
  %v1289 = vunpack.c.l.b16 %v1221
  %v1290 = vunpack.c.h.b16 %v1221
  %v1291 = vunpack.c.l.b16 %v1222
  %v1292 = vunpack.c.h.b16 %v1222
  %v1293 = vunpack.c.l.b16 %v1223
  %v1294 = vunpack.c.h.b16 %v1223
  %v1295 = vunpack.c.l.b16 %v1224
  %v1296 = vunpack.c.h.b16 %v1224
  %v1297 = vunpack.c.l.b16 %v1225
  %v1298 = vunpack.c.h.b16 %v1225
  %v1299 = vunpack.c.l.b16 %v1226
  %v1300 = vunpack.c.h.b16 %v1226
  %v1301 = vunpack.c.l.b16 %v1227
  %v1302 = vunpack.c.h.b16 %v1227
  %v1303 = vunpack.c.l.b16 %v1228
  %v1304 = vunpack.c.h.b16 %v1228
  %v1305 = vunpack.c.l.b16 %v1229
  %v1306 = vunpack.c.h.b16 %v1229
  %v1307 = vunpack.c.l.b16 %v1230
  %v1308 = vunpack.c.h.b16 %v1230
  %v1309 = vunpack.c.l.b16 %v1231
  %v1310 = vunpack.c.h.b16 %v1231
  %v1311 = vunpack.c.l.b16 %v1232
  %v1312 = vunpack.c.h.b16 %v1232
  %v1313 = vunpack.c.l.b16 %v1233
  %v1314 = vunpack.c.h.b16 %v1233
  %v1315 = vunpack.c.l.b16 %v1234
  %v1316 = vunpack.c.h.b16 %v1234
  %v1317 = vunpack.c.l.b16 %v1235
  %v1318 = vunpack.c.h.b16 %v1235
  %v1319 = vunpack.c.l.b16 %v1236
  %v1320 = vunpack.c.h.b16 %v1236
  %v1321 = vunpack.c.l.b16 %v1237
  %v1322 = vunpack.c.h.b16 %v1237
  %v1323 = vunpack.c.l.b16 %v1238
  %v1324 = vunpack.c.h.b16 %v1238
  %v1325 = vunpack.c.l.b16 %v1239
  %v1326 = vunpack.c.h.b16 %v1239
  %v1327 = vunpack.c.l.b16 %v1240
  %v1328 = vunpack.c.h.b16 %v1240
  %v1329 = vunpack.c.l.b16 %v1241
  %v1330 = vunpack.c.h.b16 %v1241
  %v1331 = vunpack.c.l.b16 %v1242
  %v1332 = vunpack.c.h.b16 %v1242
  %v1333 = vunpack.c.l.b16 %v1243
  %v1334 = vunpack.c.h.b16 %v1243
  %v1335 = vunpack.c.l.b16 %v1244
  %v1336 = vunpack.c.h.b16 %v1244
  %v1337 = vunpack.c.l.b16 %v1245
  %v1338 = vunpack.c.h.b16 %v1245
  %v1339 = vunpack.c.l.b16 %v1246
  %v1340 = vunpack.c.h.b16 %v1246
  %v1341 = vunpack.c.l.b16 %v1247
  %v1342 = vunpack.c.h.b16 %v1247
  %v1343 = vunpack.c.l.b16 %v1248
  %v1344 = vunpack.c.h.b16 %v1248
  %v1345 = vpack.c.b16 %v1283, %v1281
  %v1346 = vpack.c.b16 %v1284, %v1282
  %v1347 = vpack.c.b16 %v1287, %v1285
  %v1348 = vpack.c.b16 %v1288, %v1286
  %v1349 = vpack.c.b16 %v1291, %v1289
  %v1350 = vpack.c.b16 %v1292, %v1290
  %v1351 = vpack.c.b16 %v1295, %v1293
  %v1352 = vpack.c.b16 %v1296, %v1294
  %v1353 = vpack.c.b16 %v1299, %v1297
  %v1354 = vpack.c.b16 %v1300, %v1298
  %v1355 = vpack.c.b16 %v1303, %v1301
  %v1356 = vpack.c.b16 %v1304, %v1302
  %v1357 = vpack.c.b16 %v1307, %v1305
  %v1358 = vpack.c.b16 %v1308, %v1306
  %v1359 = vpack.c.b16 %v1311, %v1309
  %v1360 = vpack.c.b16 %v1312, %v1310
  %v1361 = vpack.c.b16 %v1315, %v1313
  %v1362 = vpack.c.b16 %v1316, %v1314
  %v1363 = vpack.c.b16 %v1319, %v1317
  %v1364 = vpack.c.b16 %v1320, %v1318
  %v1365 = vpack.c.b16 %v1323, %v1321
  %v1366 = vpack.c.b16 %v1324, %v1322
  %v1367 = vpack.c.b16 %v1327, %v1325
  %v1368 = vpack.c.b16 %v1328, %v1326
  %v1369 = vpack.c.b16 %v1331, %v1329
  %v1370 = vpack.c.b16 %v1332, %v1330
  %v1371 = vpack.c.b16 %v1335, %v1333
  %v1372 = vpack.c.b16 %v1336, %v1334
  %v1373 = vpack.c.b16 %v1339, %v1337
  %v1374 = vpack.c.b16 %v1340, %v1338
  %v1375 = vpack.c.b16 %v1343, %v1341
  %v1376 = vpack.c.b16 %v1344, %v1342
  %1409 = vmatprep.subr.bf16.mxu0 %v1346
  %1410 = vmatpush1.bf16.msra.mxu0 %v1345
  %1411 = vmatprep.subr.bf16.mxu0 %v1348
  %1412 = vmatpush1.bf16.msra.mxu0 %v1347
  %1413 = vmatprep.subr.bf16.mxu0 %v1350
  %1414 = vmatpush1.bf16.msra.mxu0 %v1349
  %1415 = vmatprep.subr.bf16.mxu0 %v1352
  %1416 = vmatpush1.bf16.msra.mxu0 %v1351
  %1417 = vmatprep.subr.bf16.mxu0 %v1354
  %1418 = vmatpush1.bf16.msra.mxu0 %v1353
  %1419 = vmatprep.subr.bf16.mxu0 %v1356
  %1420 = vmatpush1.bf16.msra.mxu0 %v1355
  %1421 = vmatprep.subr.bf16.mxu0 %v1358
  %1422 = vmatpush1.bf16.msra.mxu0 %v1357
  %1423 = vmatprep.subr.bf16.mxu0 %v1360
  %1424 = vmatpush1.bf16.msra.mxu0 %v1359
  %1425 = vmatprep.subr.bf16.mxu0 %v1362
  %1426 = vmatpush1.bf16.msra.mxu0 %v1361
  %1427 = vmatprep.subr.bf16.mxu0 %v1364
  %1428 = vmatpush1.bf16.msra.mxu0 %v1363
  %1429 = vmatprep.subr.bf16.mxu0 %v1366
  %1430 = vmatpush1.bf16.msra.mxu0 %v1365
  %1431 = vmatprep.subr.bf16.mxu0 %v1368
  %1432 = vmatpush1.bf16.msra.mxu0 %v1367
  %1433 = vmatprep.subr.bf16.mxu0 %v1370
  %1434 = vmatpush1.bf16.msra.mxu0 %v1369
  %1435 = vmatprep.subr.bf16.mxu0 %v1372
  %1436 = vmatpush1.bf16.msra.mxu0 %v1371
  %1437 = vmatprep.subr.bf16.mxu0 %v1374
  %1438 = vmatpush1.bf16.msra.mxu0 %v1373
  %1439 = vmatprep.subr.bf16.mxu0 %v1376
  %1440 = vmatpush1.bf16.msra.mxu0 %v1375
  %1441 = vmatprep.mubr.bf16.mxu0 %v958
  %1442 = vmatmul.mubr.bf16.gmra.mrb[0].mxu0 %v957
  %v1443 = vpop.f32.mrb[0].mxu0
  %v1444 = vadd.f32 0.0, %v1443
  %v1445 = vpop.f32.mrb[0].mxu0
  %v1446 = vadd.f32 0.0, %v1445
  %v1447 = vpop.f32.mrb[0].mxu0
  %v1448 = vadd.f32 0.0, %v1447
  %v1449 = vpop.f32.mrb[0].mxu0
  %v1450 = vadd.f32 0.0, %v1449
  %1451 = vmatprep.mubr.bf16.mxu0 %v960
  %1452 = vmatmul.mubr.bf16.gmra.mrb[0].mxu0 %v959
  %v1453 = vpop.f32.mrb[0].mxu0
  %v1454 = vadd.f32 0.0, %v1453
  %v1455 = vpop.f32.mrb[0].mxu0
  %v1456 = vadd.f32 0.0, %v1455
  %v1457 = vpop.f32.mrb[0].mxu0
  %v1458 = vpop.f32.mrb[0].mxu0
  %1459 = vdwg.mxu0
  %s1460 = scalar_lea.vmem %s5, 96
  %1461 = vst [vmem:[%s1460] sm:$0xff] %v1444
  %1462 = vst [vmem:[%s1460 + $0x8] sm:$0xff] %v1446
  %1463 = vst [vmem:[%s1460 + $0x10] sm:$0xff] %v1448
  %1464 = vst [vmem:[%s1460 + $0x18] sm:$0xff] %v1450
  %1465 = vst [vmem:[%s1460 + $0x20] sm:$0xf] %v1454
  %1466 = vst [vmem:[%s1460 + $0x28] sm:$0xf] %v1456
  // Predicated region
  $region22: #{main2_forward.1} parent=0 // pred_check
    _
  $region23: #{main2_forward.1} parent=0 // pred_check_branch
    %1468 = sbr.rel (0) target = $region25
  $region24: #{main2_forward.1} parent=0 // pred_region
    _
  $region25: #{main2_forward.1} parent=0 // pred_fallthru
    _
  // Predicated region
  $region26: #{main2_forward.1} parent=0 // pred_check
    _
  $region27: #{main2_forward.1} parent=0 // pred_check_branch
    %1470 = sbr.rel (0) target = $region29
  $region28: #{main2_forward.1} parent=0 // pred_region
    _
  $region29: #{main2_forward.1} parent=0 // pred_fallthru
    _

</llo_original>
